<compile_context>
chip_gen: v6e
topology: v6e:2x2x1
jax: 0.10.0
libtpu: 0.0.40
codegen_flags: <defaults>
</compile_context>

<pallas_src>
import numpy as np
import jax
import jax.numpy as jnp
from jax.experimental import pallas as pl
from jax.experimental.pallas import tpu as pltpu

_MIB = 1024 * 1024


def _round_up(x, m):
    return (x + m - 1) // m * m


def _vmem_budget_bytes():
    """~75% of physical VMEM: 48 MiB on v7x (64 MiB), 96 MiB on v5e/v6e (128 MiB)."""
    try:
        cap = int(pltpu.get_tpu_info().vmem_capacity_bytes)
    except Exception:
        cap = 64 * _MIB                      # conservative fallback (v7x-sized)
    return (cap * 3) // 4


def _spec(shape, index_map, buffers=None):
    """BlockSpec with an optional pipeline buffer count (graceful fallback)."""
    buffered_cls = getattr(pl, "Buffered", None)
    if buffers is None or buffered_cls is None:
        return pl.BlockSpec(shape, index_map)
    try:
        return pl.BlockSpec(shape, index_map, pipeline_mode=buffered_cls(buffers))
    except TypeError:
        return pl.BlockSpec(shape, index_map)


# --------------------------------------------------------------------------
# kernels
# --------------------------------------------------------------------------
def _gru_cell(x_bf16, h_f32, wg_ref, bih_ref, bhh_ref):
    """One GRU step; single fused MXU push: [x; h] (2,H) @ [W_ih | W_hh] (H,6H)."""
    H = h_f32.shape[-1]
    lhs = jnp.concatenate([x_bf16.astype(jnp.float32), h_f32], axis=0).astype(jnp.bfloat16)
    g = jnp.dot(lhs, wg_ref[...], preferred_element_type=jnp.float32)       # (2, 6H)
    gi = g[0:1, 0:3 * H] + bih_ref[...]                                     # x @ W_ih + b_ih
    gh = g[1:2, 3 * H:6 * H] + bhh_ref[...]                                 # h @ W_hh + b_hh
    r = jax.nn.sigmoid(gi[:, 0:H] + gh[:, 0:H])
    z = jax.nn.sigmoid(gi[:, H:2 * H] + gh[:, H:2 * H])
    n = jnp.tanh(gi[:, 2 * H:3 * H] + r * gh[:, 2 * H:3 * H])
    return (1.0 - z) * n + z * h_f32


def _decoder_kernel_resident(x_ref, h0_ref, wg_ref, bih_ref, bhh_ref,
                             wout_ref, bout_ref, logp_ref, h_ref):
    """grid=(T,): all weights (incl. W_out) VMEM-resident; direct log-softmax."""
    t = pl.program_id(0)

    @pl.when(t == 0)
    def _init():
        h_ref[...] = h0_ref[...]

    x = jnp.maximum(x_ref[0], 0.0)                       # relu(embedding(token)), bf16 (1,H)
    h_new = _gru_cell(x, h_ref[...], wg_ref, bih_ref, bhh_ref)
    h_ref[...] = h_new                                   # hidden carry stays VMEM-resident

    logits = jnp.dot(h_new.astype(jnp.bfloat16), wout_ref[...],
                     preferred_element_type=jnp.float32) + bout_ref[...]    # (1, Vpad) f32
    m = jnp.max(logits, axis=-1, keepdims=True)
    s = logits - m
    lse = jnp.log(jnp.sum(jnp.exp(s), axis=-1, keepdims=True))
    logp_ref[...] = (s - lse).reshape(logp_ref.shape)


def _decoder_kernel_streaming(x_ref, h0_ref, wg_ref, bih_ref, bhh_ref,
                              wout_ref, bout_ref, logp_ref, h_ref, m_s, l_s):
    """grid=(T, nv): W_out streamed in vocab tiles with online log-sum-exp."""
    t = pl.program_id(0)
    v = pl.program_id(1)
    nv = pl.num_programs(1)
    tv = wout_ref.shape[-1]

    @pl.when(v == 0)
    def _gru_step():
        @pl.when(t == 0)
        def _init():
            h_ref[...] = h0_ref[...]
        x = jnp.maximum(x_ref[0], 0.0)
        h_ref[...] = _gru_cell(x, h_ref[...], wg_ref, bih_ref, bhh_ref)
        m_s[...] = jnp.full(m_s.shape, -1e30, jnp.float32)
        l_s[...] = jnp.zeros(l_s.shape, jnp.float32)

    hb = h_ref[...].astype(jnp.bfloat16)
    logits = jnp.dot(hb, wout_ref[...], preferred_element_type=jnp.float32) + bout_ref[...]

    off = pl.multiple_of(v * tv, 128)
    logp_ref[:, :, pl.ds(off, tv)] = logits.reshape(1, 1, tv)   # raw logits (resident row)

    m_prev = m_s[...]
    m_new = jnp.maximum(m_prev, jnp.max(logits, axis=-1, keepdims=True))
    l_s[...] = l_s[...] * jnp.exp(m_prev - m_new) + \
               jnp.sum(jnp.exp(logits - m_new), axis=-1, keepdims=True)
    m_s[...] = m_new

    @pl.when(v == nv - 1)
    def _normalize():
        lse = (m_s[...] + jnp.log(l_s[...])).reshape(1, 1, 1)
        logp_ref[...] = logp_ref[...] - lse


# --------------------------------------------------------------------------
# packing / wrapper
# --------------------------------------------------------------------------
def pack_params(params, *, v_tile=None, vmem_budget_bytes=None):
    """Cast/pad PyTorch-layout f32 params into kernel layout:
    bf16 weights + embedding, concatenated [W_ih|W_hh], 128-aligned padded vocab."""
    emb = params["embedding"]
    V, H = emb.shape
    assert H % 128 == 0, "hidden_size must be a multiple of 128 (TPU lane width)"

    Vp128 = _round_up(V, 128)
    budget = _vmem_budget_bytes() if vmem_budget_bytes is None else int(vmem_budget_bytes)

    if v_tile is None:
        # resident-set estimate with W_out fully resident, constants single-buffered
        resident = (H * 6 * H * 2 + 2 * 3 * H * 4 + H * Vp128 * 2 + Vp128 * 4
                    + H * 4 + 2 * H * 2 + 2 * Vp128 * 4 + 2 * H * 4)
        if resident * 5 // 4 + 2 * _MIB <= budget:
            tv = Vp128                       # fully resident: single vocab tile, grid=(T,)
        else:
            tv = min(8192, Vp128)            # stream large tiles
    else:
        tv = _round_up(min(int(v_tile), Vp128), 128)
    Vpad = _round_up(Vp128, tv)

    w_out = jnp.pad(params["w_out"], ((0, 0), (0, Vpad - V)))
    # keep f32: -1e30 masks padded vocab lanes (would overflow to -inf in bf16)
    b_out = jnp.pad(params["b_out"].astype(jnp.float32),
                    ((0, 0), (0, Vpad - V)), constant_values=-1e30)
    w_gru = jnp.concatenate([params["w_ih"], params["w_hh"]], axis=1)      # (H, 6H)

    return {
        "H": H, "V": V, "Vpad": Vpad, "tv": tv, "budget": budget,
        "emb": emb.astype(jnp.bfloat16),                                   # (V, H)
        "w_gru": w_gru.astype(jnp.bfloat16),
        "b_ih": params["b_ih"].astype(jnp.float32),
        "b_hh": params["b_hh"].astype(jnp.float32),
        "w_out": w_out.astype(jnp.bfloat16),
        "b_out": b_out,
    }


def decoder_rnn_forward(tokens, hidden, packed):
    """T sequential DecoderRNN.forward steps fused in one Pallas kernel.

    tokens: int array of shape (T,) (or scalar / (1,1) for a single step).
    hidden: (1, 1, H) f32 previous hidden state.
    Returns (log_probs (T, V), new_hidden (1, 1, H)).  T == 1 reproduces the
    PyTorch module's forward exactly.
    """
    H, V, Vpad, tv = packed["H"], packed["V"], packed["Vpad"], packed["tv"]
    budget = packed["budget"]
    tokens = jnp.asarray(tokens, jnp.int32).reshape(-1)
    T = int(tokens.shape[0])
    nv = Vpad // tv
    h0 = jnp.asarray(hidden, jnp.float32).reshape(1, H)

    # pre-gather embedding rows -> (T, 1, H) bf16 slab (relu happens in-kernel)
    x_slab = jnp.take(packed["emb"], tokens, axis=0).reshape(T, 1, H)

    if nv == 1:
        # -------- resident path: grid=(T,), W_out lives in VMEM for all steps
        need = (H * 6 * H * 2 + 2 * 3 * H * 4 + H * Vpad * 2 + Vpad * 4 + H * 4
                + 2 * H * 2 + 2 * Vpad * 4 + 2 * H * 4)
        vmem_limit = int(min(budget, max(16 * _MIB, need * 5 // 4 + 2 * _MIB)))
        grid_spec = pltpu.PrefetchScalarGridSpec(
            num_scalar_prefetch=0,
            grid=(T,),
            in_specs=[
                pl.BlockSpec((1, 1, H), lambda t: (t, 0, 0)),        # embedding row for step t
                _spec((1, H), lambda t: (0, 0), buffers=1),          # h0 (once)
                _spec((H, 6 * H), lambda t: (0, 0), buffers=1),      # [W_ih|W_hh] resident
                _spec((1, 3 * H), lambda t: (0, 0), buffers=1),      # b_ih
                _spec((1, 3 * H), lambda t: (0, 0), buffers=1),      # b_hh
                _spec((H, Vpad), lambda t: (0, 0), buffers=1),       # W_out resident (key win)
                _spec((1, Vpad), lambda t: (0, 0), buffers=1),       # b_out
            ],
            out_specs=(
                pl.BlockSpec((1, 1, Vpad), lambda t: (t, 0, 0)),     # log-probs row t
                pl.BlockSpec((1, H), lambda t: (0, 0)),              # hidden carry -> final h
            ),
        )
        kernel = _decoder_kernel_resident
        dims = ("arbitrary",)                                        # sequential h carry
    else:
        # -------- streaming path: huge vocab; W_out tiles streamed with deep buffering
        tile_bytes = H * tv * 2 + tv * 4
        wout_bufs = 3 if 3 * tile_bytes * 2 <= budget else 2
        need = (H * 6 * H * 2 + 2 * 3 * H * 4 + H * 4 + 2 * H * 2
                + wout_bufs * tile_bytes + 2 * Vpad * 4 + 2 * H * 4 + 64)
        vmem_limit = int(min(budget, max(16 * _MIB, need * 5 // 4 + 2 * _MIB)))
        grid_spec = pltpu.PrefetchScalarGridSpec(
            num_scalar_prefetch=0,
            grid=(T, nv),
            in_specs=[
                pl.BlockSpec((1, 1, H), lambda t, v: (t, 0, 0)),
                _spec((1, H), lambda t, v: (0, 0), buffers=1),
                _spec((H, 6 * H), lambda t, v: (0, 0), buffers=1),
                _spec((1, 3 * H), lambda t, v: (0, 0), buffers=1),
                _spec((1, 3 * H), lambda t, v: (0, 0), buffers=1),
                _spec((H, tv), lambda t, v: (0, v), buffers=wout_bufs),   # streamed W_out tile
                _spec((1, tv), lambda t, v: (0, v), buffers=wout_bufs),   # streamed b_out tile
            ],
            out_specs=(
                pl.BlockSpec((1, 1, Vpad), lambda t, v: (t, 0, 0)),
                pl.BlockSpec((1, H), lambda t, v: (0, 0)),
            ),
            scratch_shapes=[
                pltpu.VMEM((1, 1), jnp.float32),    # running max
                pltpu.VMEM((1, 1), jnp.float32),    # running sum
            ],
        )
        kernel = _decoder_kernel_streaming
        dims = ("arbitrary", "arbitrary")           # both axes carry state: keep sequential

    logp3, h_fin = pl.pallas_call(
        kernel,
        grid_spec=grid_spec,
        out_shape=(
            jax.ShapeDtypeStruct((T, 1, Vpad), jnp.float32),
            jax.ShapeDtypeStruct((1, H), jnp.float32),
        ),
        compiler_params=pltpu.CompilerParams(
            dimension_semantics=dims,
            vmem_limit_bytes=vmem_limit,
        ),
    )(x_slab, h0, packed["w_gru"], packed["b_ih"], packed["b_hh"],
      packed["w_out"], packed["b_out"])

    logp = logp3.reshape(T, Vpad)[:, :V]
    return logp, h_fin.reshape(1, 1, H)


# --------------------------------------------------------------------------
# pure-JAX reference (same bf16 weight rounding) and init
# --------------------------------------------------------------------------
def decoder_rnn_reference(tokens, hidden, packed):
    H, V = packed["H"], packed["V"]
    emb = packed["emb"]
    w_ih = packed["w_gru"][:, :3 * H]
    w_hh = packed["w_gru"][:, 3 * H:]
    b_ih, b_hh = packed["b_ih"], packed["b_hh"]
    w_out, b_out = packed["w_out"][:, :V], packed["b_out"][:, :V]

    h = jnp.asarray(hidden, jnp.float32).reshape(1, H)
    outs = []
    for tok in np.asarray(tokens).reshape(-1).tolist():
        x = jnp.maximum(emb[tok].reshape(1, H), 0.0)
        gi = jnp.dot(x, w_ih, preferred_element_type=jnp.float32) + b_ih
        gh = jnp.dot(h.astype(jnp.bfloat16), w_hh, preferred_element_type=jnp.float32) + b_hh
        r = jax.nn.sigmoid(gi[:, 0:H] + gh[:, 0:H])
        z = jax.nn.sigmoid(gi[:, H:2 * H] + gh[:, H:2 * H])
        n = jnp.tanh(gi[:, 2 * H:3 * H] + r * gh[:, 2 * H:3 * H])
        h = (1.0 - z) * n + z * h
        logits = jnp.dot(h.astype(jnp.bfloat16), w_out,
                         preferred_element_type=jnp.float32) + b_out
        m = jnp.max(logits, axis=-1, keepdims=True)
        s = logits - m
        outs.append(s - jnp.log(jnp.sum(jnp.exp(s), axis=-1, keepdims=True)))
    return jnp.concatenate(outs, axis=0), h.reshape(1, 1, H)


def init_params(key, hidden_size, output_size):
    """Deterministic init (uniform +-1/sqrt(H), like PyTorch defaults)."""
    H, V = hidden_size, output_size
    ks = jax.random.split(key, 7)
    bound = 1.0 / float(np.sqrt(H))

    def u(k, shape):
        return jax.random.uniform(k, shape, jnp.float32, -bound, bound)

    return {
        "embedding": jax.random.normal(ks[0], (V, H), jnp.float32),
        # already transposed relative to PyTorch (contraction along rows)
        "w_ih": u(ks[1], (H, 3 * H)),
        "w_hh": u(ks[2], (H, 3 * H)),
        "b_ih": u(ks[3], (1, 3 * H)),
        "b_hh": u(ks[4], (1, 3 * H)),
        "w_out": u(ks[5], (H, V)),
        "b_out": u(ks[6], (1, V)),
    }


if __name__ == "__main__":
    hidden_size = 256      # as in the PyTorch spec
    output_size = 500      # vocab; padded to 512 lanes internally
    T = 8                  # fused decode steps (T=1 == the module's forward)

    key = jax.random.PRNGKey(0)
    params = init_params(key, hidden_size, output_size)

    tokens = jax.random.randint(jax.random.PRNGKey(1), (T,), 0, output_size, dtype=jnp.int32)
    hidden = jnp.zeros((1, 1, hidden_size), jnp.float32)   # initHidden()

    # default packing: W_out is tiny -> fully resident path (grid=(T,))
    packed_res = pack_params(params)
    logp, h_fin = decoder_rnn_forward(tokens, hidden, packed_res)

    # single-step call: exact DecoderRNN.forward(input, hidden) semantics
    logp1, h1 = decoder_rnn_forward(jnp.array([[3]], jnp.int32), hidden, packed_res)

    # forced small vocab tile -> exercises the streaming path + online LSE
    packed_str = pack_params(params, v_tile=256)
    logp_s, h_s = decoder_rnn_forward(tokens, hidden, packed_str)

    jax.block_until_ready((logp, h_fin, logp1, h1, logp_s, h_s))

    assert packed_res["Vpad"] // packed_res["tv"] == 1      # resident path taken
    assert packed_str["Vpad"] // packed_str["tv"] == 2      # streaming path taken
    assert logp.shape == (T, output_size)
    assert h_fin.shape == (1, 1, hidden_size)
    assert logp1.shape == (1, output_size) and h1.shape == (1, 1, hidden_size)

    # every row is a valid log-probability distribution
    np.testing.assert_allclose(np.asarray(jnp.sum(jnp.exp(logp), axis=-1)),
                               np.ones(T, np.float32), atol=1e-3)
    np.testing.assert_allclose(np.asarray(jnp.sum(jnp.exp(logp_s), axis=-1)),
                               np.ones(T, np.float32), atol=1e-3)

    # match the pure-JAX reference (same bf16 rounding) step-by-step, both paths
    ref_logp, ref_h = decoder_rnn_reference(tokens, hidden, packed_res)
    np.testing.assert_allclose(np.asarray(logp), np.asarray(ref_logp), atol=2e-2, rtol=0)
    np.testing.assert_allclose(np.asarray(h_fin), np.asarray(ref_h), atol=2e-2, rtol=0)
    np.testing.assert_allclose(np.asarray(logp_s), np.asarray(ref_logp), atol=2e-2, rtol=0)
    np.testing.assert_allclose(np.asarray(h_s), np.asarray(ref_h), atol=2e-2, rtol=0)

    print("KERNEL_OK")
</pallas_src>

<mosaic_0001>
module attributes {stable_mosaic.version = 11 : i64} {
  func.func @_decoder_kernel_resident(%arg0: i32, %arg1: memref<1x1x256xbf16, #tpu.memory_space<vmem>>, %arg2: memref<1x256xf32, #tpu.memory_space<vmem>>, %arg3: memref<256x1536xbf16, #tpu.memory_space<vmem>>, %arg4: memref<1x768xf32, #tpu.memory_space<vmem>>, %arg5: memref<1x768xf32, #tpu.memory_space<vmem>>, %arg6: memref<256x512xbf16, #tpu.memory_space<vmem>>, %arg7: memref<1x512xf32, #tpu.memory_space<vmem>>, %arg8: memref<1x1x512xf32, #tpu.memory_space<vmem>>, %arg9: memref<1x256xf32, #tpu.memory_space<vmem>>) attributes {dimension_semantics = [#tpu.dimension_semantics<arbitrary>], iteration_bounds = array<i64: 8>, scalar_prefetch = 0 : i64, scratch_operands = 0 : i64, tpu.core_type = #tpu.core_type<tc>, window_params = [{transform_indices = @transform_0, window_bounds = array<i64: 1, 1, 256>}, {pipeline_mode = #tpu.pipeline_mode<synchronous>, transform_indices = @transform_1, window_bounds = array<i64: 1, 256>}, {pipeline_mode = #tpu.pipeline_mode<synchronous>, transform_indices = @transform_2, window_bounds = array<i64: 256, 1536>}, {pipeline_mode = #tpu.pipeline_mode<synchronous>, transform_indices = @transform_3, window_bounds = array<i64: 1, 768>}, {pipeline_mode = #tpu.pipeline_mode<synchronous>, transform_indices = @transform_4, window_bounds = array<i64: 1, 768>}, {pipeline_mode = #tpu.pipeline_mode<synchronous>, transform_indices = @transform_5, window_bounds = array<i64: 256, 512>}, {pipeline_mode = #tpu.pipeline_mode<synchronous>, transform_indices = @transform_6, window_bounds = array<i64: 1, 512>}, {transform_indices = @transform_7, window_bounds = array<i64: 1, 1, 512>}, {pipeline_mode = #tpu.pipeline_mode<synchronous>, transform_indices = @transform_8, window_bounds = array<i64: 1, 256>}]} {
    %c0_i32 = arith.constant 0 : i32
    %0 = arith.cmpi eq, %arg0, %c0_i32 : i32
    %1 = arith.extui %0 : i1 to i32
    %c0_i32_0 = arith.constant 0 : i32
    %2 = arith.cmpi ne, %1, %c0_i32_0 : i32
    scf.if %2 {
      %c0_27 = arith.constant 0 : index
      %c0_28 = arith.constant 0 : index
      %63 = vector.load %arg2[%c0_27, %c0_28] : memref<1x256xf32, #tpu.memory_space<vmem>>, vector<1x256xf32>
      %c0_29 = arith.constant 0 : index
      %c0_30 = arith.constant 0 : index
      %64 = vector.load %arg9[%c0_29, %c0_30] : memref<1x256xf32, #tpu.memory_space<vmem>>, vector<1x256xf32>
      tpu.vector_store %arg9[%c0_29, %c0_30], %63 {strides = array<i32>} : memref<1x256xf32, #tpu.memory_space<vmem>>, vector<1x256xf32>,
    } else {
    }
    %c0 = arith.constant 0 : index
    %c0_1 = arith.constant 0 : index
    %c0_2 = arith.constant 0 : index
    %3 = vector.load %arg1[%c0, %c0_1, %c0_2] : memref<1x1x256xbf16, #tpu.memory_space<vmem>>, vector<1x1x256xbf16>
    %4 = vector.shape_cast %3 : vector<1x1x256xbf16> to vector<1x256xbf16>
    %cst = arith.constant 0.000000e+00 : bf16
    %5 = vector.broadcast %cst : bf16 to vector<1x256xbf16>
    %6 = arith.maximumf %4, %5 : vector<1x256xbf16>
    %c0_3 = arith.constant 0 : index
    %c0_4 = arith.constant 0 : index
    %7 = vector.load %arg9[%c0_3, %c0_4] : memref<1x256xf32, #tpu.memory_space<vmem>>, vector<1x256xf32>
    %8 = arith.extf %6 : vector<1x256xbf16> to vector<1x256xf32>
    %9 = tpu.concatenate %8, %7 in 0 : vector<1x256xf32>, vector<1x256xf32> -> vector<2x256xf32>
    %10 = arith.truncf %9 : vector<2x256xf32> to vector<2x256xbf16>
    %c0_5 = arith.constant 0 : index
    %c0_6 = arith.constant 0 : index
    %11 = vector.load %arg3[%c0_5, %c0_6] : memref<256x1536xbf16, #tpu.memory_space<vmem>>, vector<256x1536xbf16>
    %cst_7 = arith.constant dense<0.000000e+00> : vector<2x1536xf32>
    %12 = tpu.matmul %10, %11, %cst_7 {dimension_numbers = #tpu.dot_dimension_numbers<[1], [0], [0], [1], [0, 0, 1, 1], [], []>} : vector<2x256xbf16>, vector<256x1536xbf16>, vector<2x1536xf32> -> vector<2x1536xf32>
    %13 = vector.extract_strided_slice %12 {offsets = [0, 0], sizes = [1, 768], strides = [1, 1]} : vector<2x1536xf32> to vector<1x768xf32>
    %c0_8 = arith.constant 0 : index
    %c0_9 = arith.constant 0 : index
    %14 = vector.load %arg4[%c0_8, %c0_9] : memref<1x768xf32, #tpu.memory_space<vmem>>, vector<1x768xf32>
    %15 = arith.addf %13, %14 : vector<1x768xf32>
    %16 = vector.extract_strided_slice %12 {offsets = [1, 768], sizes = [1, 768], strides = [1, 1]} : vector<2x1536xf32> to vector<1x768xf32>
    %c0_10 = arith.constant 0 : index
    %c0_11 = arith.constant 0 : index
    %17 = vector.load %arg5[%c0_10, %c0_11] : memref<1x768xf32, #tpu.memory_space<vmem>>, vector<1x768xf32>
    %18 = arith.addf %16, %17 : vector<1x768xf32>
    %19 = vector.extract_strided_slice %15 {offsets = [0, 0], sizes = [1, 256], strides = [1, 1]} : vector<1x768xf32> to vector<1x256xf32>
    %20 = vector.extract_strided_slice %18 {offsets = [0, 0], sizes = [1, 256], strides = [1, 1]} : vector<1x768xf32> to vector<1x256xf32>
    %21 = arith.addf %19, %20 : vector<1x256xf32>
    %22 = arith.negf %21 : vector<1x256xf32>
    %23 = math.exp %22 : vector<1x256xf32>
    %cst_12 = arith.constant 1.000000e+00 : f32
    %24 = vector.broadcast %cst_12 : f32 to vector<1x256xf32>
    %25 = arith.addf %24, %23 : vector<1x256xf32>
    %26 = arith.divf %24, %25 : vector<1x256xf32>
    %27 = vector.extract_strided_slice %15 {offsets = [0, 256], sizes = [1, 256], strides = [1, 1]} : vector<1x768xf32> to vector<1x256xf32>
    %28 = vector.extract_strided_slice %18 {offsets = [0, 256], sizes = [1, 256], strides = [1, 1]} : vector<1x768xf32> to vector<1x256xf32>
    %29 = arith.addf %27, %28 : vector<1x256xf32>
    %30 = arith.negf %29 : vector<1x256xf32>
    %31 = math.exp %30 : vector<1x256xf32>
    %cst_13 = arith.constant 1.000000e+00 : f32
    %32 = vector.broadcast %cst_13 : f32 to vector<1x256xf32>
    %33 = arith.addf %32, %31 : vector<1x256xf32>
    %34 = arith.divf %32, %33 : vector<1x256xf32>
    %35 = vector.extract_strided_slice %15 {offsets = [0, 512], sizes = [1, 256], strides = [1, 1]} : vector<1x768xf32> to vector<1x256xf32>
    %36 = vector.extract_strided_slice %18 {offsets = [0, 512], sizes = [1, 256], strides = [1, 1]} : vector<1x768xf32> to vector<1x256xf32>
    %37 = arith.mulf %26, %36 : vector<1x256xf32>
    %38 = arith.addf %35, %37 : vector<1x256xf32>
    %39 = math.tanh %38 : vector<1x256xf32>
    %cst_14 = arith.constant 1.000000e+00 : f32
    %40 = vector.broadcast %cst_14 : f32 to vector<1x256xf32>
    %41 = arith.subf %40, %34 : vector<1x256xf32>
    %42 = arith.mulf %41, %39 : vector<1x256xf32>
    %43 = arith.mulf %34, %7 : vector<1x256xf32>
    %44 = arith.addf %42, %43 : vector<1x256xf32>
    %c0_15 = arith.constant 0 : index
    %c0_16 = arith.constant 0 : index
    %45 = vector.load %arg9[%c0_15, %c0_16] : memref<1x256xf32, #tpu.memory_space<vmem>>, vector<1x256xf32>
    tpu.vector_store %arg9[%c0_15, %c0_16], %44 {strides = array<i32>} : memref<1x256xf32, #tpu.memory_space<vmem>>, vector<1x256xf32>,
    %46 = arith.truncf %44 : vector<1x256xf32> to vector<1x256xbf16>
    %c0_17 = arith.constant 0 : index
    %c0_18 = arith.constant 0 : index
    %47 = vector.load %arg6[%c0_17, %c0_18] : memref<256x512xbf16, #tpu.memory_space<vmem>>, vector<256x512xbf16>
    %cst_19 = arith.constant dense<0.000000e+00> : vector<1x512xf32>
    %48 = tpu.matmul %46, %47, %cst_19 {dimension_numbers = #tpu.dot_dimension_numbers<[1], [0], [0], [1], [0, 0, 1, 1], [], []>} : vector<1x256xbf16>, vector<256x512xbf16>, vector<1x512xf32> -> vector<1x512xf32>
    %c0_20 = arith.constant 0 : index
    %c0_21 = arith.constant 0 : index
    %49 = vector.load %arg7[%c0_20, %c0_21] : memref<1x512xf32, #tpu.memory_space<vmem>>, vector<1x512xf32>
    %50 = arith.addf %48, %49 : vector<1x512xf32>
    %cst_22 = arith.constant dense<0xFF800000> : vector<1xf32>
    %51 = vector.multi_reduction <maximumf>, %50, %cst_22 [1] : vector<1x512xf32> to vector<1xf32>
    %52 = vector.shape_cast %51 : vector<1xf32> to vector<1x1xf32>
    %53 = vector.broadcast %52 : vector<1x1xf32> to vector<1x512xf32>
    %54 = arith.subf %50, %53 : vector<1x512xf32>
    %55 = math.exp %54 : vector<1x512xf32>
    %cst_23 = arith.constant dense<0.000000e+00> : vector<1xf32>
    %56 = vector.multi_reduction <add>, %55, %cst_23 [1] : vector<1x512xf32> to vector<1xf32>
    %57 = vector.shape_cast %56 : vector<1xf32> to vector<1x1xf32>
    %58 = math.log %57 : vector<1x1xf32>
    %59 = vector.broadcast %58 : vector<1x1xf32> to vector<1x512xf32>
    %60 = arith.subf %54, %59 : vector<1x512xf32>
    %61 = vector.shape_cast %60 : vector<1x512xf32> to vector<1x1x512xf32>
    %c0_24 = arith.constant 0 : index
    %c0_25 = arith.constant 0 : index
    %c0_26 = arith.constant 0 : index
    %62 = vector.load %arg8[%c0_24, %c0_25, %c0_26] : memref<1x1x512xf32, #tpu.memory_space<vmem>>, vector<1x1x512xf32>
    tpu.vector_store %arg8[%c0_24, %c0_25, %c0_26], %61 {strides = array<i32>} : memref<1x1x512xf32, #tpu.memory_space<vmem>>, vector<1x1x512xf32>,
    return
  }
  func.func @transform_0(%arg0: i32) -> (i32, i32, i32) {
    %c0_i32 = arith.constant 0 : i32
    %c0_i32_0 = arith.constant 0 : i32
    %c0_i32_1 = arith.constant 0 : i32
    return %arg0, %c0_i32, %c0_i32_0 : i32, i32, i32
  }
  func.func @transform_1(%arg0: i32) -> (i32, i32) {
    %c0_i32 = arith.constant 0 : i32
    %c0_i32_0 = arith.constant 0 : i32
    %c0_i32_1 = arith.constant 0 : i32
    return %c0_i32, %c0_i32_0 : i32, i32
  }
  func.func @transform_2(%arg0: i32) -> (i32, i32) {
    %c0_i32 = arith.constant 0 : i32
    %c0_i32_0 = arith.constant 0 : i32
    %c0_i32_1 = arith.constant 0 : i32
    return %c0_i32, %c0_i32_0 : i32, i32
  }
  func.func @transform_3(%arg0: i32) -> (i32, i32) {
    %c0_i32 = arith.constant 0 : i32
    %c0_i32_0 = arith.constant 0 : i32
    %c0_i32_1 = arith.constant 0 : i32
    return %c0_i32, %c0_i32_0 : i32, i32
  }
  func.func @transform_4(%arg0: i32) -> (i32, i32) {
    %c0_i32 = arith.constant 0 : i32
    %c0_i32_0 = arith.constant 0 : i32
    %c0_i32_1 = arith.constant 0 : i32
    return %c0_i32, %c0_i32_0 : i32, i32
  }
  func.func @transform_5(%arg0: i32) -> (i32, i32) {
    %c0_i32 = arith.constant 0 : i32
    %c0_i32_0 = arith.constant 0 : i32
    %c0_i32_1 = arith.constant 0 : i32
    return %c0_i32, %c0_i32_0 : i32, i32
  }
  func.func @transform_6(%arg0: i32) -> (i32, i32) {
    %c0_i32 = arith.constant 0 : i32
    %c0_i32_0 = arith.constant 0 : i32
    %c0_i32_1 = arith.constant 0 : i32
    return %c0_i32, %c0_i32_0 : i32, i32
  }
  func.func @transform_7(%arg0: i32) -> (i32, i32, i32) {
    %c0_i32 = arith.constant 0 : i32
    %c0_i32_0 = arith.constant 0 : i32
    %c0_i32_1 = arith.constant 0 : i32
    return %arg0, %c0_i32, %c0_i32_0 : i32, i32, i32
  }
  func.func @transform_8(%arg0: i32) -> (i32, i32) {
    %c0_i32 = arith.constant 0 : i32
    %c0_i32_0 = arith.constant 0 : i32
    %c0_i32_1 = arith.constant 0 : i32
    return %c0_i32, %c0_i32_0 : i32, i32
  }
}

</mosaic_0001>

<llo_original>
// kernel: tpu_custom_call.1
$region0: #{tpu_custom_call.1}
  #allocation0 [shape = 'u32[]', space=smem, size = 0x4, offset = 0x4, fixed_abs, tag = 'smem constant byte address 0x4 - core index']
  #allocation1 [shape = 'u32[144,128]{1,0:T(1,128)}', space=vmem, size = 0x12000, scoped, tag = 'internal scratch']
  %s0 = inlined_call_operand.vmem [shape: bf16[8,1,256], index: 0, kind: input, shape index: {}]
  %s1 = inlined_call_operand.vmem [shape: f32[1,256], index: 1, kind: input, shape index: {}]
  %s2 = inlined_call_operand.hbm [shape: bf16[256,1536], index: 2, kind: input, shape index: {}]
  %s3 = inlined_call_operand.vmem [shape: f32[1,768], index: 3, kind: input, shape index: {}]
  %s4 = inlined_call_operand.vmem [shape: f32[1,768], index: 4, kind: input, shape index: {}]
  %s5 = inlined_call_operand.hbm [shape: bf16[256,512], index: 5, kind: input, shape index: {}]
  %s6 = inlined_call_operand.vmem [shape: f32[1,512], index: 6, kind: input, shape index: {}]
  %s7 = inlined_call_operand.hbm [shape: f32[8,1,512], index: 7, kind: output, shape index: {0}]
  %s8 = inlined_call_operand.hbm [shape: f32[1,256], index: 8, kind: output, shape index: {1}]
  %9 = xla_tuple %s7, %s8
  %s10 = sld [smem:[#allocation0]]
  $region81: #{tpu_custom_call.1} parent=0
    _
  %s12 = ssub.s32 1, %s10
  %s13 = scalar_select 0, %s12, %s10
  $region1: #{tpu_custom_call.1} parent=0
    #allocation2 [shape = 'u8[786432]{0}', space=vmem, size = 0xc0000, scoped, tag = 'input window, operand 2, single buffered']
    #allocation3 [shape = 's32[2]{0}', space=sflag, size = 0x8, scoped, tag = 'scoped memory for tpu_custom_call.1']
    #allocation4 [shape = 's32[2]{0}', space=sflag, size = 0x8, scoped, tag = 'scoped memory for tpu_custom_call.1']
    #allocation5 [shape = 'u8[262144]{0}', space=vmem, size = 0x40000, scoped, tag = 'input window, operand 5, single buffered']
    #allocation6 [shape = 's32[1]{0}', space=sflag, size = 0x4, scoped, tag = 'scoped memory for tpu_custom_call.1']
    #allocation7 [shape = 'u8[4096]{0}', space=vmem, size = 0x1000, scoped, tag = 'output window, operand 0']
    #allocation8 [shape = 'u8[1024]{0}', space=vmem, size = 0x400, scoped, tag = 'output window, operand 1, single buffered']
    #allocation9 [shape = 's32[1]{0}', space=sflag, size = 0x4, scoped, tag = 'scoped memory for tpu_custom_call.1']
    %14 = vsyncpa [#allocation3], 0
    %15 = vsyncpa [#allocation6], 0
    %16 = vsyncpa [#allocation4], 0
    %s17 = scalar_lea.sflag [#allocation4], 1
    %18 = vsyncpa %s17, 0
    %19 = vsyncpa [#allocation9], 0
    loop: start=0, step=1, limit=10
    $region2: #{tpu_custom_call.1} parent=1 // loop_pre_header
      _
    $region3: #{tpu_custom_call.1} parent=1 // loop_header
      %s21 = sphi 0, %s25
      %p22 = scmp.ge.s32.totalorder %s21, 10
      %s31 = sphi 0, %s33
      %s34 = sphi 0, %s31
      %s35 = sphi 0, %s34
      %s51 = sphi 0, %s35
      %s55 = sphi 0, %s55
      %s57 = sphi 0, %s55
      %s58 = sphi 0, %s57
      %s72 = sphi 0, %s58
      %s76 = sphi 0, %s76
      %s78 = sphi 0, %s76
      %s79 = sphi 0, %s78
      %s93 = sphi 0, %s79
      %s97 = sphi 0, %s97
      %s99 = sphi 0, %s97
      %s100 = sphi 0, %s99
      %s114 = sphi 0, %s100
      %s118 = sphi 0, %s118
      %s120 = sphi 0, %s118
      %s121 = sphi 0, %s120
      %s135 = sphi 0, %s121
      %s139 = sphi 0, %s139
      %s141 = sphi 0, %s139
      %s142 = sphi 0, %s141
      %s156 = sphi 0, %s142
      %s160 = sphi 0, %s160
      %s162 = sphi 0, %s160
      %s163 = sphi 0, %s162
      %s177 = sphi 0, %s163
      %s183 = sphi 0, %s185
      %s186 = sphi 0, %s183
      %s187 = sphi 0, %s186
      %s203 = sphi 0, %s187
      %s207 = sphi 0, %s207
      %s209 = sphi 0, %s207
      %s210 = sphi 0, %s209
      %s224 = sphi 0, %s210
    $region4: #{tpu_custom_call.1} parent=1 // loop_header_branch
      %24 = sbr.rel (%p22) target = $region8
    $region5: #{tpu_custom_call.1} parent=1 // loop_body
      %s26 = ssub.s32 %s21, 1
      %s27 = ssub.s32 %s21, 2
      %s28 = sadd.s32 %s21, 1
      %s29 = ssub.s32 %s21, %s28
      %p30 = scmp.eq.s32.totalorder %s29, 0
      %s32 = sadd.s32 %s31, 1
      %s33 = scalar_select %p30, %s31, %s32
      %p36 = pneg %p30
      %p37 = scmp.eq.s32.totalorder %s21, 7
      %p38 = por %p36, %p37
      %p39 = scmp.ne.s32.totalorder %s31, %s34
      %p40 = scmp.eq.s32.totalorder %s21, 0
      %p41 = por %p39, %p40
      %p42 = scmp.ne.s32.totalorder %s31, %s34
      %p43 = scmp.eq.s32.totalorder %s26, 7
      %p44 = por %p42, %p43
      %p45 = scmp.ne.s32.totalorder %s34, %s35
      %p46 = scmp.eq.s32.totalorder %s26, 0
      %p47 = por %p45, %p46
      %p48 = scmp.ne.s32.totalorder %s34, %s35
      %p49 = scmp.eq.s32.totalorder %s27, 7
      %p50 = por %p48, %p49
      %p52 = scmp.ne.s32.totalorder %s35, %s51
      %p53 = scmp.eq.s32.totalorder %s27, 0
      %p54 = por %p52, %p53
      %s56 = sadd.s32 %s55, 1
      %p59 = scmp.eq.s32.totalorder %s21, 7
      %p60 = scmp.ne.s32.totalorder %s55, %s57
      %p61 = scmp.eq.s32.totalorder %s21, 0
      %p62 = por %p60, %p61
      %p63 = scmp.ne.s32.totalorder %s55, %s57
      %p64 = scmp.eq.s32.totalorder %s26, 7
      %p65 = por %p63, %p64
      %p66 = scmp.ne.s32.totalorder %s57, %s58
      %p67 = scmp.eq.s32.totalorder %s26, 0
      %p68 = por %p66, %p67
      %p69 = scmp.ne.s32.totalorder %s57, %s58
      %p70 = scmp.eq.s32.totalorder %s27, 7
      %p71 = por %p69, %p70
      %p73 = scmp.ne.s32.totalorder %s58, %s72
      %p74 = scmp.eq.s32.totalorder %s27, 0
      %p75 = por %p73, %p74
      %s77 = sadd.s32 %s76, 1
      %p80 = scmp.eq.s32.totalorder %s21, 7
      %p81 = scmp.ne.s32.totalorder %s76, %s78
      %p82 = scmp.eq.s32.totalorder %s21, 0
      %p83 = por %p81, %p82
      %p84 = scmp.ne.s32.totalorder %s76, %s78
      %p85 = scmp.eq.s32.totalorder %s26, 7
      %p86 = por %p84, %p85
      %p87 = scmp.ne.s32.totalorder %s78, %s79
      %p88 = scmp.eq.s32.totalorder %s26, 0
      %p89 = por %p87, %p88
      %p90 = scmp.ne.s32.totalorder %s78, %s79
      %p91 = scmp.eq.s32.totalorder %s27, 7
      %p92 = por %p90, %p91
      %p94 = scmp.ne.s32.totalorder %s79, %s93
      %p95 = scmp.eq.s32.totalorder %s27, 0
      %p96 = por %p94, %p95
      %s98 = sadd.s32 %s97, 1
      %p101 = scmp.eq.s32.totalorder %s21, 7
      %p102 = scmp.ne.s32.totalorder %s97, %s99
      %p103 = scmp.eq.s32.totalorder %s21, 0
      %p104 = por %p102, %p103
      %p105 = scmp.ne.s32.totalorder %s97, %s99
      %p106 = scmp.eq.s32.totalorder %s26, 7
      %p107 = por %p105, %p106
      %p108 = scmp.ne.s32.totalorder %s99, %s100
      %p109 = scmp.eq.s32.totalorder %s26, 0
      %p110 = por %p108, %p109
      %p111 = scmp.ne.s32.totalorder %s99, %s100
      %p112 = scmp.eq.s32.totalorder %s27, 7
      %p113 = por %p111, %p112
      %p115 = scmp.ne.s32.totalorder %s100, %s114
      %p116 = scmp.eq.s32.totalorder %s27, 0
      %p117 = por %p115, %p116
      %s119 = sadd.s32 %s118, 1
      %p122 = scmp.eq.s32.totalorder %s21, 7
      %p123 = scmp.ne.s32.totalorder %s118, %s120
      %p124 = scmp.eq.s32.totalorder %s21, 0
      %p125 = por %p123, %p124
      %p126 = scmp.ne.s32.totalorder %s118, %s120
      %p127 = scmp.eq.s32.totalorder %s26, 7
      %p128 = por %p126, %p127
      %p129 = scmp.ne.s32.totalorder %s120, %s121
      %p130 = scmp.eq.s32.totalorder %s26, 0
      %p131 = por %p129, %p130
      %p132 = scmp.ne.s32.totalorder %s120, %s121
      %p133 = scmp.eq.s32.totalorder %s27, 7
      %p134 = por %p132, %p133
      %p136 = scmp.ne.s32.totalorder %s121, %s135
      %p137 = scmp.eq.s32.totalorder %s27, 0
      %p138 = por %p136, %p137
      %s140 = sadd.s32 %s139, 1
      %p143 = scmp.eq.s32.totalorder %s21, 7
      %p144 = scmp.ne.s32.totalorder %s139, %s141
      %p145 = scmp.eq.s32.totalorder %s21, 0
      %p146 = por %p144, %p145
      %p147 = scmp.ne.s32.totalorder %s139, %s141
      %p148 = scmp.eq.s32.totalorder %s26, 7
      %p149 = por %p147, %p148
      %p150 = scmp.ne.s32.totalorder %s141, %s142
      %p151 = scmp.eq.s32.totalorder %s26, 0
      %p152 = por %p150, %p151
      %p153 = scmp.ne.s32.totalorder %s141, %s142
      %p154 = scmp.eq.s32.totalorder %s27, 7
      %p155 = por %p153, %p154
      %p157 = scmp.ne.s32.totalorder %s142, %s156
      %p158 = scmp.eq.s32.totalorder %s27, 0
      %p159 = por %p157, %p158
      %s161 = sadd.s32 %s160, 1
      %p164 = scmp.eq.s32.totalorder %s21, 7
      %p165 = scmp.ne.s32.totalorder %s160, %s162
      %p166 = scmp.eq.s32.totalorder %s21, 0
      %p167 = por %p165, %p166
      %p168 = scmp.ne.s32.totalorder %s160, %s162
      %p169 = scmp.eq.s32.totalorder %s26, 7
      %p170 = por %p168, %p169
      %p171 = scmp.ne.s32.totalorder %s162, %s163
      %p172 = scmp.eq.s32.totalorder %s26, 0
      %p173 = por %p171, %p172
      %p174 = scmp.ne.s32.totalorder %s162, %s163
      %p175 = scmp.eq.s32.totalorder %s27, 7
      %p176 = por %p174, %p175
      %p178 = scmp.ne.s32.totalorder %s163, %s177
      %p179 = scmp.eq.s32.totalorder %s27, 0
      %p180 = por %p178, %p179
      %s181 = ssub.s32 %s21, %s28
      %p182 = scmp.eq.s32.totalorder %s181, 0
      %s184 = sadd.s32 %s183, 1
      %s185 = scalar_select %p182, %s183, %s184
      %p188 = pneg %p182
      %p189 = scmp.eq.s32.totalorder %s21, 7
      %p190 = por %p188, %p189
      %p191 = scmp.ne.s32.totalorder %s183, %s186
      %p192 = scmp.eq.s32.totalorder %s21, 0
      %p193 = por %p191, %p192
      %p194 = scmp.ne.s32.totalorder %s183, %s186
      %p195 = scmp.eq.s32.totalorder %s26, 7
      %p196 = por %p194, %p195
      %p197 = scmp.ne.s32.totalorder %s186, %s187
      %p198 = scmp.eq.s32.totalorder %s26, 0
      %p199 = por %p197, %p198
      %p200 = scmp.ne.s32.totalorder %s186, %s187
      %p201 = scmp.eq.s32.totalorder %s27, 7
      %p202 = por %p200, %p201
      %p204 = scmp.ne.s32.totalorder %s187, %s203
      %p205 = scmp.eq.s32.totalorder %s27, 0
      %p206 = por %p204, %p205
      %s208 = sadd.s32 %s207, 1
      %p211 = scmp.eq.s32.totalorder %s21, 7
      %p212 = scmp.ne.s32.totalorder %s207, %s209
      %p213 = scmp.eq.s32.totalorder %s21, 0
      %p214 = por %p212, %p213
      %p215 = scmp.ne.s32.totalorder %s207, %s209
      %p216 = scmp.eq.s32.totalorder %s26, 7
      %p217 = por %p215, %p216
      %p218 = scmp.ne.s32.totalorder %s209, %s210
      %p219 = scmp.eq.s32.totalorder %s26, 0
      %p220 = por %p218, %p219
      %p221 = scmp.ne.s32.totalorder %s209, %s210
      %p222 = scmp.eq.s32.totalorder %s27, 7
      %p223 = por %p221, %p222
      %p225 = scmp.ne.s32.totalorder %s210, %s224
      %p226 = scmp.eq.s32.totalorder %s27, 0
      %p227 = por %p225, %p226
      %p228 = scmp.le.s32.totalorder 1, %s21
      %p229 = scmp.lt.s32.totalorder %s21, 9
      %p230 = pnand %p228, %p229
      %p231 = pneg %p230
      // Predicated region
      $region9: #{tpu_custom_call.1} parent=5 // pred_check
        _
      $region10: #{tpu_custom_call.1} parent=5 // pred_check_branch
        %233 = sbr.rel (%p230) target = $region12
      $region11: #{tpu_custom_call.1} parent=5 // pred_region
        %s234 = ssub.s32 %s21, 1
        // Predicated region
        $region13: #{tpu_custom_call.1} parent=11 // pred_check
          %p235 = pneg %p68
        $region14: #{tpu_custom_call.1} parent=11 // pred_check_branch
          %237 = sbr.rel (%p235) target = $region16
        $region15: #{tpu_custom_call.1} parent=11 // pred_region
          _
        $region16: #{tpu_custom_call.1} parent=11 // pred_fallthru
          _
        // Predicated region
        $region17: #{tpu_custom_call.1} parent=11 // pred_check
          %p238 = pneg %p89
        $region18: #{tpu_custom_call.1} parent=11 // pred_check_branch
          %240 = sbr.rel (%p238) target = $region20
        $region19: #{tpu_custom_call.1} parent=11 // pred_region
          %s242 = ssub.s32 24576, 24576
          %243 = vsyncadd [#allocation3], %s242
          %s244 = sshll.u32 [#allocation2], 4
          %s245 = int_to_ptr.vmem [resolvable:$true] %s244
          %250 = dma.hbm_to_vmem [thread:$0]  %s2, 24576, %s245, [#allocation3], 768, 768, 48
        $region20: #{tpu_custom_call.1} parent=11 // pred_fallthru
          _
        // Predicated region
        $region21: #{tpu_custom_call.1} parent=11 // pred_check
          %p251 = pneg %p110
        $region22: #{tpu_custom_call.1} parent=11 // pred_check_branch
          %253 = sbr.rel (%p251) target = $region24
        $region23: #{tpu_custom_call.1} parent=11 // pred_region
          _
        $region24: #{tpu_custom_call.1} parent=11 // pred_fallthru
          _
        // Predicated region
        $region25: #{tpu_custom_call.1} parent=11 // pred_check
          %p254 = pneg %p131
        $region26: #{tpu_custom_call.1} parent=11 // pred_check_branch
          %256 = sbr.rel (%p254) target = $region28
        $region27: #{tpu_custom_call.1} parent=11 // pred_region
          _
        $region28: #{tpu_custom_call.1} parent=11 // pred_fallthru
          _
        // Predicated region
        $region29: #{tpu_custom_call.1} parent=11 // pred_check
          %p257 = pneg %p152
        $region30: #{tpu_custom_call.1} parent=11 // pred_check_branch
          %259 = sbr.rel (%p257) target = $region32
        $region31: #{tpu_custom_call.1} parent=11 // pred_region
          %s261 = ssub.s32 8192, 8192
          %262 = vsyncadd [#allocation6], %s261
          %s263 = sshll.u32 [#allocation5], 4
          %s264 = int_to_ptr.vmem [resolvable:$true] %s263
          %269 = dma.hbm_to_vmem [thread:$0]  %s5, 8192, %s264, [#allocation6], 256, 256, 16
        $region32: #{tpu_custom_call.1} parent=11 // pred_fallthru
          _
        // Predicated region
        $region33: #{tpu_custom_call.1} parent=11 // pred_check
          %p270 = pneg %p173
        $region34: #{tpu_custom_call.1} parent=11 // pred_check_branch
          %272 = sbr.rel (%p270) target = $region36
        $region35: #{tpu_custom_call.1} parent=11 // pred_region
          _
        $region36: #{tpu_custom_call.1} parent=11 // pred_fallthru
          _
      $region12: #{tpu_custom_call.1} parent=5 // pred_fallthru
        _
      %p273 = scmp.lt.s32.totalorder %s21, 8
      // Predicated region
      $region37: #{tpu_custom_call.1} parent=5 // pred_check
        %p274 = pneg %p273
      $region38: #{tpu_custom_call.1} parent=5 // pred_check_branch
        %276 = sbr.rel (%p274) target = $region40
      $region39: #{tpu_custom_call.1} parent=5 // pred_region
        // Predicated region
        $region41: #{tpu_custom_call.1} parent=39 // pred_check
          %p277 = pneg %p41
        $region42: #{tpu_custom_call.1} parent=39 // pred_check_branch
          %279 = sbr.rel (%p277) target = $region44
        $region43: #{tpu_custom_call.1} parent=39 // pred_region
          %p280 = scmp.lt.s32.totalorder %s21, 7
          %s281 = scalar_select %p280, %s21, 7
          %s282 = smul.addr %s281, 2
          %s283 = scalar_lea.vmem %s0, %s282
        $region44: #{tpu_custom_call.1} parent=39 // pred_fallthru
          _
      $region40: #{tpu_custom_call.1} parent=5 // pred_fallthru
        _
      %p284 = scmp.le.s32.totalorder 1, %s21
      %p285 = scmp.lt.s32.totalorder %s21, 9
      %p286 = pnand %p284, %p285
      %p287 = pneg %p286
      // Predicated region
      $region45: #{tpu_custom_call.1} parent=5 // pred_check
        _
      $region46: #{tpu_custom_call.1} parent=5 // pred_check_branch
        %289 = sbr.rel (%p286) target = $region48
      $region47: #{tpu_custom_call.1} parent=5 // pred_region
        %s290 = ssub.s32 %s21, 1
        // Predicated region
        $region49: #{tpu_custom_call.1} parent=47 // pred_check
          %p291 = pneg %p89
        $region50: #{tpu_custom_call.1} parent=47 // pred_check_branch
          %293 = sbr.rel (%p291) target = $region52
        $region51: #{tpu_custom_call.1} parent=47 // pred_region
          %294 = dma.done [#allocation3], 24576
        $region52: #{tpu_custom_call.1} parent=47 // pred_fallthru
          _
        // Predicated region
        $region53: #{tpu_custom_call.1} parent=47 // pred_check
          %p295 = pneg %p152
        $region54: #{tpu_custom_call.1} parent=47 // pred_check_branch
          %297 = sbr.rel (%p295) target = $region56
        $region55: #{tpu_custom_call.1} parent=47 // pred_region
          %298 = dma.done [#allocation6], 8192
        $region56: #{tpu_custom_call.1} parent=47 // pred_fallthru
          _
        %p299 = scmp.lt.s32.totalorder %s26, 7
        %s300 = scalar_select %p299, %s26, 7
        %s301 = smul.addr %s300, 2
        %s302 = scalar_lea.vmem %s0, %s301
        %p303 = pneg %p47
        %p304 = pneg %p44
        %p305 = pneg %p68
        %p306 = pneg %p65
        %p307 = pneg %p89
        %p308 = pneg %p86
        %p309 = pneg %p110
        %p310 = pneg %p107
        %p311 = pneg %p131
        %p312 = pneg %p128
        %p313 = pneg %p152
        %p314 = pneg %p149
        %p315 = pneg %p173
        %p316 = pneg %p170
        %p317 = pneg %p199
        %p318 = pneg %p196
        %s319 = sand.u32 %s186, 1
        %s320 = scalar_lea.sflag [#allocation4], %s319
        %s321 = sand.u32 %s186, 1
        %s322 = smul.addr %s321, 4
        %s323 = scalar_lea.vmem [#allocation7], %s322
        %p324 = pneg %p220
        %p325 = pneg %p217
        %p326 = scmp.lt.s32.totalorder %s26, 7
        %s327 = scalar_select %p326, %s26, 7
        %s328 = smul.addr %s327, 2
        %s329 = scalar_lea.vmem %s0, %s328
        %p331 = scmp.eq.s32.totalorder %s26, 0
        // Predicated region
        $region57: #{tpu_custom_call.1} parent=47 // pred_check
          %p332 = pneg %p331
        $region58: #{tpu_custom_call.1} parent=47 // pred_check_branch
          %334 = sbr.rel (%p332) target = $region60
        $region59: #{tpu_custom_call.1} parent=47 // pred_region
          %v335 = vld [vmem:[%s1] sm:$0x3]
          %v336 = vlaneseq
          %vm337 = vcmp.ge.s32.totalorder %v336, 0
          %vm338 = vcmp.lt.s32.totalorder %v336, 256
          %vm339 = vmand %vm337, %vm338
          %340 = vst.msk [vmem:[#allocation8] sm:$0x3] %vm339, %v335
        $region60: #{tpu_custom_call.1} parent=47 // pred_fallthru
          _
        %v341 = vld [vmem:[%s329] sm:$0x3]
        %v342 = vmax.bf16 %v341, 0
        %v343 = vld [vmem:[#allocation8] sm:$0x3]
        %v344 = vunpack.c.l.bf16 %v342
        %v346 = vlaneseq
        %v347 = vshrl.u32 %v346, 7
        %v348 = vsub.s32 0, %v347
        %v349 = vrot.slane %v344, %v348
        %v350 = vlaneseq
        %v351 = vshrl.u32 %v350, 7
        %v352 = vsub.s32 2, %v351
        %v353 = vrot.slane %v344, %v352
        %v357 = vlaneseq
        %v358 = vshrl.u32 %v357, 7
        %v359 = vsub.s32 0, %v358
        %v360 = vrot.slane %v343, %v359
        %v361 = vlaneseq
        %v362 = vshrl.u32 %v361, 7
        %v363 = vsub.s32 1, %v362
        %v364 = vrot.slane %v343, %v363
        %vm367 = vcmask 1040384
        %v368 = vsel %vm367, %v349, %v360
        %v369 = vsel %vm367, %v353, %v364
        %v370 = vpack.c.bf16 %v368, %v368
        %v371 = vpack.c.bf16 %v369, %v369
        %v372 = vld [vmem:[#allocation2] sm:$0xff]
        %v373 = vld [vmem:[#allocation2 + $0x8] sm:$0xff]
        %v374 = vld [vmem:[#allocation2 + $0x10] sm:$0xff]
        %v375 = vld [vmem:[#allocation2 + $0x18] sm:$0xff]
        %v376 = vld [vmem:[#allocation2 + $0x20] sm:$0xff]
        %v377 = vld [vmem:[#allocation2 + $0x28] sm:$0xff]
        %v378 = vld [vmem:[#allocation2 + $0x30] sm:$0xff]
        %v379 = vld [vmem:[#allocation2 + $0x38] sm:$0xff]
        %v380 = vld [vmem:[#allocation2 + $0x40] sm:$0xff]
        %v381 = vld [vmem:[#allocation2 + $0x48] sm:$0xff]
        %v382 = vld [vmem:[#allocation2 + $0x50] sm:$0xff]
        %v383 = vld [vmem:[#allocation2 + $0x58] sm:$0xff]
        %v384 = vld [vmem:[#allocation2 + $0x60] sm:$0xff]
        %v385 = vld [vmem:[#allocation2 + $0x68] sm:$0xff]
        %v386 = vld [vmem:[#allocation2 + $0x70] sm:$0xff]
        %v387 = vld [vmem:[#allocation2 + $0x78] sm:$0xff]
        %v388 = vld [vmem:[#allocation2 + $0x80] sm:$0xff]
        %v389 = vld [vmem:[#allocation2 + $0x88] sm:$0xff]
        %v390 = vld [vmem:[#allocation2 + $0x90] sm:$0xff]
        %v391 = vld [vmem:[#allocation2 + $0x98] sm:$0xff]
        %v392 = vld [vmem:[#allocation2 + $0xa0] sm:$0xff]
        %v393 = vld [vmem:[#allocation2 + $0xa8] sm:$0xff]
        %v394 = vld [vmem:[#allocation2 + $0xb0] sm:$0xff]
        %v395 = vld [vmem:[#allocation2 + $0xb8] sm:$0xff]
        %v396 = vld [vmem:[#allocation2 + $0xc0] sm:$0xff]
        %v397 = vld [vmem:[#allocation2 + $0xc8] sm:$0xff]
        %v398 = vld [vmem:[#allocation2 + $0xd0] sm:$0xff]
        %v399 = vld [vmem:[#allocation2 + $0xd8] sm:$0xff]
        %v400 = vld [vmem:[#allocation2 + $0xe0] sm:$0xff]
        %v401 = vld [vmem:[#allocation2 + $0xe8] sm:$0xff]
        %v402 = vld [vmem:[#allocation2 + $0xf0] sm:$0xff]
        %v403 = vld [vmem:[#allocation2 + $0xf8] sm:$0xff]
        %v404 = vld [vmem:[#allocation2 + $0x100] sm:$0xff]
        %v405 = vld [vmem:[#allocation2 + $0x108] sm:$0xff]
        %v406 = vld [vmem:[#allocation2 + $0x110] sm:$0xff]
        %v407 = vld [vmem:[#allocation2 + $0x118] sm:$0xff]
        %v408 = vld [vmem:[#allocation2 + $0x120] sm:$0xff]
        %v409 = vld [vmem:[#allocation2 + $0x128] sm:$0xff]
        %v410 = vld [vmem:[#allocation2 + $0x130] sm:$0xff]
        %v411 = vld [vmem:[#allocation2 + $0x138] sm:$0xff]
        %v412 = vld [vmem:[#allocation2 + $0x140] sm:$0xff]
        %v413 = vld [vmem:[#allocation2 + $0x148] sm:$0xff]
        %v414 = vld [vmem:[#allocation2 + $0x150] sm:$0xff]
        %v415 = vld [vmem:[#allocation2 + $0x158] sm:$0xff]
        %v416 = vld [vmem:[#allocation2 + $0x160] sm:$0xff]
        %v417 = vld [vmem:[#allocation2 + $0x168] sm:$0xff]
        %v418 = vld [vmem:[#allocation2 + $0x170] sm:$0xff]
        %v419 = vld [vmem:[#allocation2 + $0x178] sm:$0xff]
        %v420 = vld [vmem:[#allocation2 + $0x180] sm:$0xff]
        %v421 = vld [vmem:[#allocation2 + $0x188] sm:$0xff]
        %v422 = vld [vmem:[#allocation2 + $0x190] sm:$0xff]
        %v423 = vld [vmem:[#allocation2 + $0x198] sm:$0xff]
        %v424 = vld [vmem:[#allocation2 + $0x1a0] sm:$0xff]
        %v425 = vld [vmem:[#allocation2 + $0x1a8] sm:$0xff]
        %v426 = vld [vmem:[#allocation2 + $0x1b0] sm:$0xff]
        %v427 = vld [vmem:[#allocation2 + $0x1b8] sm:$0xff]
        %v428 = vld [vmem:[#allocation2 + $0x1c0] sm:$0xff]
        %v429 = vld [vmem:[#allocation2 + $0x1c8] sm:$0xff]
        %v430 = vld [vmem:[#allocation2 + $0x1d0] sm:$0xff]
        %v431 = vld [vmem:[#allocation2 + $0x1d8] sm:$0xff]
        %v432 = vld [vmem:[#allocation2 + $0x1e0] sm:$0xff]
        %v433 = vld [vmem:[#allocation2 + $0x1e8] sm:$0xff]
        %v434 = vld [vmem:[#allocation2 + $0x1f0] sm:$0xff]
        %v435 = vld [vmem:[#allocation2 + $0x1f8] sm:$0xff]
        %v436 = vld [vmem:[#allocation2 + $0x200] sm:$0xff]
        %v437 = vld [vmem:[#allocation2 + $0x208] sm:$0xff]
        %v438 = vld [vmem:[#allocation2 + $0x210] sm:$0xff]
        %v439 = vld [vmem:[#allocation2 + $0x218] sm:$0xff]
        %v440 = vld [vmem:[#allocation2 + $0x220] sm:$0xff]
        %v441 = vld [vmem:[#allocation2 + $0x228] sm:$0xff]
        %v442 = vld [vmem:[#allocation2 + $0x230] sm:$0xff]
        %v443 = vld [vmem:[#allocation2 + $0x238] sm:$0xff]
        %v444 = vld [vmem:[#allocation2 + $0x240] sm:$0xff]
        %v445 = vld [vmem:[#allocation2 + $0x248] sm:$0xff]
        %v446 = vld [vmem:[#allocation2 + $0x250] sm:$0xff]
        %v447 = vld [vmem:[#allocation2 + $0x258] sm:$0xff]
        %v448 = vld [vmem:[#allocation2 + $0x260] sm:$0xff]
        %v449 = vld [vmem:[#allocation2 + $0x268] sm:$0xff]
        %v450 = vld [vmem:[#allocation2 + $0x270] sm:$0xff]
        %v451 = vld [vmem:[#allocation2 + $0x278] sm:$0xff]
        %v452 = vld [vmem:[#allocation2 + $0x280] sm:$0xff]
        %v453 = vld [vmem:[#allocation2 + $0x288] sm:$0xff]
        %v454 = vld [vmem:[#allocation2 + $0x290] sm:$0xff]
        %v455 = vld [vmem:[#allocation2 + $0x298] sm:$0xff]
        %v456 = vld [vmem:[#allocation2 + $0x2a0] sm:$0xff]
        %v457 = vld [vmem:[#allocation2 + $0x2a8] sm:$0xff]
        %v458 = vld [vmem:[#allocation2 + $0x2b0] sm:$0xff]
        %v459 = vld [vmem:[#allocation2 + $0x2b8] sm:$0xff]
        %v460 = vld [vmem:[#allocation2 + $0x2c0] sm:$0xff]
        %v461 = vld [vmem:[#allocation2 + $0x2c8] sm:$0xff]
        %v462 = vld [vmem:[#allocation2 + $0x2d0] sm:$0xff]
        %v463 = vld [vmem:[#allocation2 + $0x2d8] sm:$0xff]
        %v464 = vld [vmem:[#allocation2 + $0x2e0] sm:$0xff]
        %v465 = vld [vmem:[#allocation2 + $0x2e8] sm:$0xff]
        %v466 = vld [vmem:[#allocation2 + $0x2f0] sm:$0xff]
        %v467 = vld [vmem:[#allocation2 + $0x2f8] sm:$0xff]
        %v468 = vld [vmem:[#allocation2 + $0x300] sm:$0xff]
        %v469 = vld [vmem:[#allocation2 + $0x308] sm:$0xff]
        %v470 = vld [vmem:[#allocation2 + $0x310] sm:$0xff]
        %v471 = vld [vmem:[#allocation2 + $0x318] sm:$0xff]
        %v472 = vld [vmem:[#allocation2 + $0x320] sm:$0xff]
        %v473 = vld [vmem:[#allocation2 + $0x328] sm:$0xff]
        %v474 = vld [vmem:[#allocation2 + $0x330] sm:$0xff]
        %v475 = vld [vmem:[#allocation2 + $0x338] sm:$0xff]
        %v476 = vld [vmem:[#allocation2 + $0x340] sm:$0xff]
        %v477 = vld [vmem:[#allocation2 + $0x348] sm:$0xff]
        %v478 = vld [vmem:[#allocation2 + $0x350] sm:$0xff]
        %v479 = vld [vmem:[#allocation2 + $0x358] sm:$0xff]
        %v480 = vld [vmem:[#allocation2 + $0x360] sm:$0xff]
        %v481 = vld [vmem:[#allocation2 + $0x368] sm:$0xff]
        %v482 = vld [vmem:[#allocation2 + $0x370] sm:$0xff]
        %v483 = vld [vmem:[#allocation2 + $0x378] sm:$0xff]
        %v484 = vld [vmem:[#allocation2 + $0x380] sm:$0xff]
        %v485 = vld [vmem:[#allocation2 + $0x388] sm:$0xff]
        %v486 = vld [vmem:[#allocation2 + $0x390] sm:$0xff]
        %v487 = vld [vmem:[#allocation2 + $0x398] sm:$0xff]
        %v488 = vld [vmem:[#allocation2 + $0x3a0] sm:$0xff]
        %v489 = vld [vmem:[#allocation2 + $0x3a8] sm:$0xff]
        %v490 = vld [vmem:[#allocation2 + $0x3b0] sm:$0xff]
        %v491 = vld [vmem:[#allocation2 + $0x3b8] sm:$0xff]
        %v492 = vld [vmem:[#allocation2 + $0x3c0] sm:$0xff]
        %v493 = vld [vmem:[#allocation2 + $0x3c8] sm:$0xff]
        %v494 = vld [vmem:[#allocation2 + $0x3d0] sm:$0xff]
        %v495 = vld [vmem:[#allocation2 + $0x3d8] sm:$0xff]
        %v496 = vld [vmem:[#allocation2 + $0x3e0] sm:$0xff]
        %v497 = vld [vmem:[#allocation2 + $0x3e8] sm:$0xff]
        %v498 = vld [vmem:[#allocation2 + $0x3f0] sm:$0xff]
        %v499 = vld [vmem:[#allocation2 + $0x3f8] sm:$0xff]
        %v500 = vld [vmem:[#allocation2 + $0x400] sm:$0xff]
        %v501 = vld [vmem:[#allocation2 + $0x408] sm:$0xff]
        %v502 = vld [vmem:[#allocation2 + $0x410] sm:$0xff]
        %v503 = vld [vmem:[#allocation2 + $0x418] sm:$0xff]
        %v504 = vld [vmem:[#allocation2 + $0x420] sm:$0xff]
        %v505 = vld [vmem:[#allocation2 + $0x428] sm:$0xff]
        %v506 = vld [vmem:[#allocation2 + $0x430] sm:$0xff]
        %v507 = vld [vmem:[#allocation2 + $0x438] sm:$0xff]
        %v508 = vld [vmem:[#allocation2 + $0x440] sm:$0xff]
        %v509 = vld [vmem:[#allocation2 + $0x448] sm:$0xff]
        %v510 = vld [vmem:[#allocation2 + $0x450] sm:$0xff]
        %v511 = vld [vmem:[#allocation2 + $0x458] sm:$0xff]
        %v512 = vld [vmem:[#allocation2 + $0x460] sm:$0xff]
        %v513 = vld [vmem:[#allocation2 + $0x468] sm:$0xff]
        %v514 = vld [vmem:[#allocation2 + $0x470] sm:$0xff]
        %v515 = vld [vmem:[#allocation2 + $0x478] sm:$0xff]
        %v516 = vld [vmem:[#allocation2 + $0x480] sm:$0xff]
        %v517 = vld [vmem:[#allocation2 + $0x488] sm:$0xff]
        %v518 = vld [vmem:[#allocation2 + $0x490] sm:$0xff]
        %v519 = vld [vmem:[#allocation2 + $0x498] sm:$0xff]
        %v520 = vld [vmem:[#allocation2 + $0x4a0] sm:$0xff]
        %v521 = vld [vmem:[#allocation2 + $0x4a8] sm:$0xff]
        %v522 = vld [vmem:[#allocation2 + $0x4b0] sm:$0xff]
        %v523 = vld [vmem:[#allocation2 + $0x4b8] sm:$0xff]
        %v524 = vld [vmem:[#allocation2 + $0x4c0] sm:$0xff]
        %v525 = vld [vmem:[#allocation2 + $0x4c8] sm:$0xff]
        %v526 = vld [vmem:[#allocation2 + $0x4d0] sm:$0xff]
        %v527 = vld [vmem:[#allocation2 + $0x4d8] sm:$0xff]
        %v528 = vld [vmem:[#allocation2 + $0x4e0] sm:$0xff]
        %v529 = vld [vmem:[#allocation2 + $0x4e8] sm:$0xff]
        %v530 = vld [vmem:[#allocation2 + $0x4f0] sm:$0xff]
        %v531 = vld [vmem:[#allocation2 + $0x4f8] sm:$0xff]
        %v532 = vld [vmem:[#allocation2 + $0x500] sm:$0xff]
        %v533 = vld [vmem:[#allocation2 + $0x508] sm:$0xff]
        %v534 = vld [vmem:[#allocation2 + $0x510] sm:$0xff]
        %v535 = vld [vmem:[#allocation2 + $0x518] sm:$0xff]
        %v536 = vld [vmem:[#allocation2 + $0x520] sm:$0xff]
        %v537 = vld [vmem:[#allocation2 + $0x528] sm:$0xff]
        %v538 = vld [vmem:[#allocation2 + $0x530] sm:$0xff]
        %v539 = vld [vmem:[#allocation2 + $0x538] sm:$0xff]
        %v540 = vld [vmem:[#allocation2 + $0x540] sm:$0xff]
        %v541 = vld [vmem:[#allocation2 + $0x548] sm:$0xff]
        %v542 = vld [vmem:[#allocation2 + $0x550] sm:$0xff]
        %v543 = vld [vmem:[#allocation2 + $0x558] sm:$0xff]
        %v544 = vld [vmem:[#allocation2 + $0x560] sm:$0xff]
        %v545 = vld [vmem:[#allocation2 + $0x568] sm:$0xff]
        %v546 = vld [vmem:[#allocation2 + $0x570] sm:$0xff]
        %v547 = vld [vmem:[#allocation2 + $0x578] sm:$0xff]
        %v548 = vld [vmem:[#allocation2 + $0x580] sm:$0xff]
        %v549 = vld [vmem:[#allocation2 + $0x588] sm:$0xff]
        %v550 = vld [vmem:[#allocation2 + $0x590] sm:$0xff]
        %v551 = vld [vmem:[#allocation2 + $0x598] sm:$0xff]
        %v552 = vld [vmem:[#allocation2 + $0x5a0] sm:$0xff]
        %v553 = vld [vmem:[#allocation2 + $0x5a8] sm:$0xff]
        %v554 = vld [vmem:[#allocation2 + $0x5b0] sm:$0xff]
        %v555 = vld [vmem:[#allocation2 + $0x5b8] sm:$0xff]
        %v556 = vld [vmem:[#allocation2 + $0x5c0] sm:$0xff]
        %v557 = vld [vmem:[#allocation2 + $0x5c8] sm:$0xff]
        %v558 = vld [vmem:[#allocation2 + $0x5d0] sm:$0xff]
        %v559 = vld [vmem:[#allocation2 + $0x5d8] sm:$0xff]
        %v560 = vld [vmem:[#allocation2 + $0x5e0] sm:$0xff]
        %v561 = vld [vmem:[#allocation2 + $0x5e8] sm:$0xff]
        %v562 = vld [vmem:[#allocation2 + $0x5f0] sm:$0xff]
        %v563 = vld [vmem:[#allocation2 + $0x5f8] sm:$0xff]
        %v756 = vunpack.c.l.b16 %v372
        %v757 = vunpack.c.h.b16 %v372
        %v758 = vunpack.c.l.b16 %v373
        %v759 = vunpack.c.h.b16 %v373
        %v760 = vunpack.c.l.b16 %v374
        %v761 = vunpack.c.h.b16 %v374
        %v762 = vunpack.c.l.b16 %v375
        %v763 = vunpack.c.h.b16 %v375
        %v764 = vunpack.c.l.b16 %v376
        %v765 = vunpack.c.h.b16 %v376
        %v766 = vunpack.c.l.b16 %v377
        %v767 = vunpack.c.h.b16 %v377
        %v768 = vunpack.c.l.b16 %v378
        %v769 = vunpack.c.h.b16 %v378
        %v770 = vunpack.c.l.b16 %v379
        %v771 = vunpack.c.h.b16 %v379
        %v772 = vunpack.c.l.b16 %v380
        %v773 = vunpack.c.h.b16 %v380
        %v774 = vunpack.c.l.b16 %v381
        %v775 = vunpack.c.h.b16 %v381
        %v776 = vunpack.c.l.b16 %v382
        %v777 = vunpack.c.h.b16 %v382
        %v778 = vunpack.c.l.b16 %v383
        %v779 = vunpack.c.h.b16 %v383
        %v780 = vunpack.c.l.b16 %v384
        %v781 = vunpack.c.h.b16 %v384
        %v782 = vunpack.c.l.b16 %v385
        %v783 = vunpack.c.h.b16 %v385
        %v784 = vunpack.c.l.b16 %v386
        %v785 = vunpack.c.h.b16 %v386
        %v786 = vunpack.c.l.b16 %v387
        %v787 = vunpack.c.h.b16 %v387
        %v788 = vunpack.c.l.b16 %v388
        %v789 = vunpack.c.h.b16 %v388
        %v790 = vunpack.c.l.b16 %v389
        %v791 = vunpack.c.h.b16 %v389
        %v792 = vunpack.c.l.b16 %v390
        %v793 = vunpack.c.h.b16 %v390
        %v794 = vunpack.c.l.b16 %v391
        %v795 = vunpack.c.h.b16 %v391
        %v796 = vunpack.c.l.b16 %v392
        %v797 = vunpack.c.h.b16 %v392
        %v798 = vunpack.c.l.b16 %v393
        %v799 = vunpack.c.h.b16 %v393
        %v800 = vunpack.c.l.b16 %v394
        %v801 = vunpack.c.h.b16 %v394
        %v802 = vunpack.c.l.b16 %v395
        %v803 = vunpack.c.h.b16 %v395
        %v804 = vunpack.c.l.b16 %v396
        %v805 = vunpack.c.h.b16 %v396
        %v806 = vunpack.c.l.b16 %v397
        %v807 = vunpack.c.h.b16 %v397
        %v808 = vunpack.c.l.b16 %v398
        %v809 = vunpack.c.h.b16 %v398
        %v810 = vunpack.c.l.b16 %v399
        %v811 = vunpack.c.h.b16 %v399
        %v812 = vunpack.c.l.b16 %v400
        %v813 = vunpack.c.h.b16 %v400
        %v814 = vunpack.c.l.b16 %v401
        %v815 = vunpack.c.h.b16 %v401
        %v816 = vunpack.c.l.b16 %v402
        %v817 = vunpack.c.h.b16 %v402
        %v818 = vunpack.c.l.b16 %v403
        %v819 = vunpack.c.h.b16 %v403
        %v820 = vunpack.c.l.b16 %v404
        %v821 = vunpack.c.h.b16 %v404
        %v822 = vunpack.c.l.b16 %v405
        %v823 = vunpack.c.h.b16 %v405
        %v824 = vunpack.c.l.b16 %v406
        %v825 = vunpack.c.h.b16 %v406
        %v826 = vunpack.c.l.b16 %v407
        %v827 = vunpack.c.h.b16 %v407
        %v828 = vunpack.c.l.b16 %v408
        %v829 = vunpack.c.h.b16 %v408
        %v830 = vunpack.c.l.b16 %v409
        %v831 = vunpack.c.h.b16 %v409
        %v832 = vunpack.c.l.b16 %v410
        %v833 = vunpack.c.h.b16 %v410
        %v834 = vunpack.c.l.b16 %v411
        %v835 = vunpack.c.h.b16 %v411
        %v836 = vunpack.c.l.b16 %v412
        %v837 = vunpack.c.h.b16 %v412
        %v838 = vunpack.c.l.b16 %v413
        %v839 = vunpack.c.h.b16 %v413
        %v840 = vunpack.c.l.b16 %v414
        %v841 = vunpack.c.h.b16 %v414
        %v842 = vunpack.c.l.b16 %v415
        %v843 = vunpack.c.h.b16 %v415
        %v844 = vunpack.c.l.b16 %v416
        %v845 = vunpack.c.h.b16 %v416
        %v846 = vunpack.c.l.b16 %v417
        %v847 = vunpack.c.h.b16 %v417
        %v848 = vunpack.c.l.b16 %v418
        %v849 = vunpack.c.h.b16 %v418
        %v850 = vunpack.c.l.b16 %v419
        %v851 = vunpack.c.h.b16 %v419
        %v852 = vunpack.c.l.b16 %v420
        %v853 = vunpack.c.h.b16 %v420
        %v854 = vunpack.c.l.b16 %v421
        %v855 = vunpack.c.h.b16 %v421
        %v856 = vunpack.c.l.b16 %v422
        %v857 = vunpack.c.h.b16 %v422
        %v858 = vunpack.c.l.b16 %v423
        %v859 = vunpack.c.h.b16 %v423
        %v860 = vunpack.c.l.b16 %v424
        %v861 = vunpack.c.h.b16 %v424
        %v862 = vunpack.c.l.b16 %v425
        %v863 = vunpack.c.h.b16 %v425
        %v864 = vunpack.c.l.b16 %v426
        %v865 = vunpack.c.h.b16 %v426
        %v866 = vunpack.c.l.b16 %v427
        %v867 = vunpack.c.h.b16 %v427
        %v868 = vunpack.c.l.b16 %v428
        %v869 = vunpack.c.h.b16 %v428
        %v870 = vunpack.c.l.b16 %v429
        %v871 = vunpack.c.h.b16 %v429
        %v872 = vunpack.c.l.b16 %v430
        %v873 = vunpack.c.h.b16 %v430
        %v874 = vunpack.c.l.b16 %v431
        %v875 = vunpack.c.h.b16 %v431
        %v876 = vunpack.c.l.b16 %v432
        %v877 = vunpack.c.h.b16 %v432
        %v878 = vunpack.c.l.b16 %v433
        %v879 = vunpack.c.h.b16 %v433
        %v880 = vunpack.c.l.b16 %v434
        %v881 = vunpack.c.h.b16 %v434
        %v882 = vunpack.c.l.b16 %v435
        %v883 = vunpack.c.h.b16 %v435
        %v884 = vunpack.c.l.b16 %v436
        %v885 = vunpack.c.h.b16 %v436
        %v886 = vunpack.c.l.b16 %v437
        %v887 = vunpack.c.h.b16 %v437
        %v888 = vunpack.c.l.b16 %v438
        %v889 = vunpack.c.h.b16 %v438
        %v890 = vunpack.c.l.b16 %v439
        %v891 = vunpack.c.h.b16 %v439
        %v892 = vunpack.c.l.b16 %v440
        %v893 = vunpack.c.h.b16 %v440
        %v894 = vunpack.c.l.b16 %v441
        %v895 = vunpack.c.h.b16 %v441
        %v896 = vunpack.c.l.b16 %v442
        %v897 = vunpack.c.h.b16 %v442
        %v898 = vunpack.c.l.b16 %v443
        %v899 = vunpack.c.h.b16 %v443
        %v900 = vunpack.c.l.b16 %v444
        %v901 = vunpack.c.h.b16 %v444
        %v902 = vunpack.c.l.b16 %v445
        %v903 = vunpack.c.h.b16 %v445
        %v904 = vunpack.c.l.b16 %v446
        %v905 = vunpack.c.h.b16 %v446
        %v906 = vunpack.c.l.b16 %v447
        %v907 = vunpack.c.h.b16 %v447
        %v908 = vunpack.c.l.b16 %v448
        %v909 = vunpack.c.h.b16 %v448
        %v910 = vunpack.c.l.b16 %v449
        %v911 = vunpack.c.h.b16 %v449
        %v912 = vunpack.c.l.b16 %v450
        %v913 = vunpack.c.h.b16 %v450
        %v914 = vunpack.c.l.b16 %v451
        %v915 = vunpack.c.h.b16 %v451
        %v916 = vunpack.c.l.b16 %v452
        %v917 = vunpack.c.h.b16 %v452
        %v918 = vunpack.c.l.b16 %v453
        %v919 = vunpack.c.h.b16 %v453
        %v920 = vunpack.c.l.b16 %v454
        %v921 = vunpack.c.h.b16 %v454
        %v922 = vunpack.c.l.b16 %v455
        %v923 = vunpack.c.h.b16 %v455
        %v924 = vunpack.c.l.b16 %v456
        %v925 = vunpack.c.h.b16 %v456
        %v926 = vunpack.c.l.b16 %v457
        %v927 = vunpack.c.h.b16 %v457
        %v928 = vunpack.c.l.b16 %v458
        %v929 = vunpack.c.h.b16 %v458
        %v930 = vunpack.c.l.b16 %v459
        %v931 = vunpack.c.h.b16 %v459
        %v932 = vunpack.c.l.b16 %v460
        %v933 = vunpack.c.h.b16 %v460
        %v934 = vunpack.c.l.b16 %v461
        %v935 = vunpack.c.h.b16 %v461
        %v936 = vunpack.c.l.b16 %v462
        %v937 = vunpack.c.h.b16 %v462
        %v938 = vunpack.c.l.b16 %v463
        %v939 = vunpack.c.h.b16 %v463
        %v940 = vunpack.c.l.b16 %v464
        %v941 = vunpack.c.h.b16 %v464
        %v942 = vunpack.c.l.b16 %v465
        %v943 = vunpack.c.h.b16 %v465
        %v944 = vunpack.c.l.b16 %v466
        %v945 = vunpack.c.h.b16 %v466
        %v946 = vunpack.c.l.b16 %v467
        %v947 = vunpack.c.h.b16 %v467
        %v948 = vunpack.c.l.b16 %v468
        %v949 = vunpack.c.h.b16 %v468
        %v950 = vunpack.c.l.b16 %v469
        %v951 = vunpack.c.h.b16 %v469
        %v952 = vunpack.c.l.b16 %v470
        %v953 = vunpack.c.h.b16 %v470
        %v954 = vunpack.c.l.b16 %v471
        %v955 = vunpack.c.h.b16 %v471
        %v956 = vunpack.c.l.b16 %v472
        %v957 = vunpack.c.h.b16 %v472
        %v958 = vunpack.c.l.b16 %v473
        %v959 = vunpack.c.h.b16 %v473
        %v960 = vunpack.c.l.b16 %v474
        %v961 = vunpack.c.h.b16 %v474
        %v962 = vunpack.c.l.b16 %v475
        %v963 = vunpack.c.h.b16 %v475
        %v964 = vunpack.c.l.b16 %v476
        %v965 = vunpack.c.h.b16 %v476
        %v966 = vunpack.c.l.b16 %v477
        %v967 = vunpack.c.h.b16 %v477
        %v968 = vunpack.c.l.b16 %v478
        %v969 = vunpack.c.h.b16 %v478
        %v970 = vunpack.c.l.b16 %v479
        %v971 = vunpack.c.h.b16 %v479
        %v972 = vunpack.c.l.b16 %v480
        %v973 = vunpack.c.h.b16 %v480
        %v974 = vunpack.c.l.b16 %v481
        %v975 = vunpack.c.h.b16 %v481
        %v976 = vunpack.c.l.b16 %v482
        %v977 = vunpack.c.h.b16 %v482
        %v978 = vunpack.c.l.b16 %v483
        %v979 = vunpack.c.h.b16 %v483
        %v980 = vunpack.c.l.b16 %v484
        %v981 = vunpack.c.h.b16 %v484
        %v982 = vunpack.c.l.b16 %v485
        %v983 = vunpack.c.h.b16 %v485
        %v984 = vunpack.c.l.b16 %v486
        %v985 = vunpack.c.h.b16 %v486
        %v986 = vunpack.c.l.b16 %v487
        %v987 = vunpack.c.h.b16 %v487
        %v988 = vunpack.c.l.b16 %v488
        %v989 = vunpack.c.h.b16 %v488
        %v990 = vunpack.c.l.b16 %v489
        %v991 = vunpack.c.h.b16 %v489
        %v992 = vunpack.c.l.b16 %v490
        %v993 = vunpack.c.h.b16 %v490
        %v994 = vunpack.c.l.b16 %v491
        %v995 = vunpack.c.h.b16 %v491
        %v996 = vunpack.c.l.b16 %v492
        %v997 = vunpack.c.h.b16 %v492
        %v998 = vunpack.c.l.b16 %v493
        %v999 = vunpack.c.h.b16 %v493
        %v1000 = vunpack.c.l.b16 %v494
        %v1001 = vunpack.c.h.b16 %v494
        %v1002 = vunpack.c.l.b16 %v495
        %v1003 = vunpack.c.h.b16 %v495
        %v1004 = vunpack.c.l.b16 %v496
        %v1005 = vunpack.c.h.b16 %v496
        %v1006 = vunpack.c.l.b16 %v497
        %v1007 = vunpack.c.h.b16 %v497
        %v1008 = vunpack.c.l.b16 %v498
        %v1009 = vunpack.c.h.b16 %v498
        %v1010 = vunpack.c.l.b16 %v499
        %v1011 = vunpack.c.h.b16 %v499
        %v1012 = vunpack.c.l.b16 %v500
        %v1013 = vunpack.c.h.b16 %v500
        %v1014 = vunpack.c.l.b16 %v501
        %v1015 = vunpack.c.h.b16 %v501
        %v1016 = vunpack.c.l.b16 %v502
        %v1017 = vunpack.c.h.b16 %v502
        %v1018 = vunpack.c.l.b16 %v503
        %v1019 = vunpack.c.h.b16 %v503
        %v1020 = vunpack.c.l.b16 %v504
        %v1021 = vunpack.c.h.b16 %v504
        %v1022 = vunpack.c.l.b16 %v505
        %v1023 = vunpack.c.h.b16 %v505
        %v1024 = vunpack.c.l.b16 %v506
        %v1025 = vunpack.c.h.b16 %v506
        %v1026 = vunpack.c.l.b16 %v507
        %v1027 = vunpack.c.h.b16 %v507
        %v1028 = vunpack.c.l.b16 %v508
        %v1029 = vunpack.c.h.b16 %v508
        %v1030 = vunpack.c.l.b16 %v509
        %v1031 = vunpack.c.h.b16 %v509
        %v1032 = vunpack.c.l.b16 %v510
        %v1033 = vunpack.c.h.b16 %v510
        %v1034 = vunpack.c.l.b16 %v511
        %v1035 = vunpack.c.h.b16 %v511
        %v1036 = vunpack.c.l.b16 %v512
        %v1037 = vunpack.c.h.b16 %v512
        %v1038 = vunpack.c.l.b16 %v513
        %v1039 = vunpack.c.h.b16 %v513
        %v1040 = vunpack.c.l.b16 %v514
        %v1041 = vunpack.c.h.b16 %v514
        %v1042 = vunpack.c.l.b16 %v515
        %v1043 = vunpack.c.h.b16 %v515
        %v1044 = vunpack.c.l.b16 %v516
        %v1045 = vunpack.c.h.b16 %v516
        %v1046 = vunpack.c.l.b16 %v517
        %v1047 = vunpack.c.h.b16 %v517
        %v1048 = vunpack.c.l.b16 %v518
        %v1049 = vunpack.c.h.b16 %v518
        %v1050 = vunpack.c.l.b16 %v519
        %v1051 = vunpack.c.h.b16 %v519
        %v1052 = vunpack.c.l.b16 %v520
        %v1053 = vunpack.c.h.b16 %v520
        %v1054 = vunpack.c.l.b16 %v521
        %v1055 = vunpack.c.h.b16 %v521
        %v1056 = vunpack.c.l.b16 %v522
        %v1057 = vunpack.c.h.b16 %v522
        %v1058 = vunpack.c.l.b16 %v523
        %v1059 = vunpack.c.h.b16 %v523
        %v1060 = vunpack.c.l.b16 %v524
        %v1061 = vunpack.c.h.b16 %v524
        %v1062 = vunpack.c.l.b16 %v525
        %v1063 = vunpack.c.h.b16 %v525
        %v1064 = vunpack.c.l.b16 %v526
        %v1065 = vunpack.c.h.b16 %v526
        %v1066 = vunpack.c.l.b16 %v527
        %v1067 = vunpack.c.h.b16 %v527
        %v1068 = vunpack.c.l.b16 %v528
        %v1069 = vunpack.c.h.b16 %v528
        %v1070 = vunpack.c.l.b16 %v529
        %v1071 = vunpack.c.h.b16 %v529
        %v1072 = vunpack.c.l.b16 %v530
        %v1073 = vunpack.c.h.b16 %v530
        %v1074 = vunpack.c.l.b16 %v531
        %v1075 = vunpack.c.h.b16 %v531
        %v1076 = vunpack.c.l.b16 %v532
        %v1077 = vunpack.c.h.b16 %v532
        %v1078 = vunpack.c.l.b16 %v533
        %v1079 = vunpack.c.h.b16 %v533
        %v1080 = vunpack.c.l.b16 %v534
        %v1081 = vunpack.c.h.b16 %v534
        %v1082 = vunpack.c.l.b16 %v535
        %v1083 = vunpack.c.h.b16 %v535
        %v1084 = vunpack.c.l.b16 %v536
        %v1085 = vunpack.c.h.b16 %v536
        %v1086 = vunpack.c.l.b16 %v537
        %v1087 = vunpack.c.h.b16 %v537
        %v1088 = vunpack.c.l.b16 %v538
        %v1089 = vunpack.c.h.b16 %v538
        %v1090 = vunpack.c.l.b16 %v539
        %v1091 = vunpack.c.h.b16 %v539
        %v1092 = vunpack.c.l.b16 %v540
        %v1093 = vunpack.c.h.b16 %v540
        %v1094 = vunpack.c.l.b16 %v541
        %v1095 = vunpack.c.h.b16 %v541
        %v1096 = vunpack.c.l.b16 %v542
        %v1097 = vunpack.c.h.b16 %v542
        %v1098 = vunpack.c.l.b16 %v543
        %v1099 = vunpack.c.h.b16 %v543
        %v1100 = vunpack.c.l.b16 %v544
        %v1101 = vunpack.c.h.b16 %v544
        %v1102 = vunpack.c.l.b16 %v545
        %v1103 = vunpack.c.h.b16 %v545
        %v1104 = vunpack.c.l.b16 %v546
        %v1105 = vunpack.c.h.b16 %v546
        %v1106 = vunpack.c.l.b16 %v547
        %v1107 = vunpack.c.h.b16 %v547
        %v1108 = vunpack.c.l.b16 %v548
        %v1109 = vunpack.c.h.b16 %v548
        %v1110 = vunpack.c.l.b16 %v549
        %v1111 = vunpack.c.h.b16 %v549
        %v1112 = vunpack.c.l.b16 %v550
        %v1113 = vunpack.c.h.b16 %v550
        %v1114 = vunpack.c.l.b16 %v551
        %v1115 = vunpack.c.h.b16 %v551
        %v1116 = vunpack.c.l.b16 %v552
        %v1117 = vunpack.c.h.b16 %v552
        %v1118 = vunpack.c.l.b16 %v553
        %v1119 = vunpack.c.h.b16 %v553
        %v1120 = vunpack.c.l.b16 %v554
        %v1121 = vunpack.c.h.b16 %v554
        %v1122 = vunpack.c.l.b16 %v555
        %v1123 = vunpack.c.h.b16 %v555
        %v1124 = vunpack.c.l.b16 %v556
        %v1125 = vunpack.c.h.b16 %v556
        %v1126 = vunpack.c.l.b16 %v557
        %v1127 = vunpack.c.h.b16 %v557
        %v1128 = vunpack.c.l.b16 %v558
        %v1129 = vunpack.c.h.b16 %v558
        %v1130 = vunpack.c.l.b16 %v559
        %v1131 = vunpack.c.h.b16 %v559
        %v1132 = vunpack.c.l.b16 %v560
        %v1133 = vunpack.c.h.b16 %v560
        %v1134 = vunpack.c.l.b16 %v561
        %v1135 = vunpack.c.h.b16 %v561
        %v1136 = vunpack.c.l.b16 %v562
        %v1137 = vunpack.c.h.b16 %v562
        %v1138 = vunpack.c.l.b16 %v563
        %v1139 = vunpack.c.h.b16 %v563
        %v1140 = vpack.c.b16 %v768, %v756
        %v1141 = vpack.c.b16 %v769, %v757
        %v1142 = vpack.c.b16 %v770, %v758
        %v1143 = vpack.c.b16 %v771, %v759
        %v1144 = vpack.c.b16 %v772, %v760
        %v1145 = vpack.c.b16 %v773, %v761
        %v1146 = vpack.c.b16 %v774, %v762
        %v1147 = vpack.c.b16 %v775, %v763
        %v1148 = vpack.c.b16 %v776, %v764
        %v1149 = vpack.c.b16 %v777, %v765
        %v1150 = vpack.c.b16 %v778, %v766
        %v1151 = vpack.c.b16 %v779, %v767
        %v1152 = vpack.c.b16 %v792, %v780
        %v1153 = vpack.c.b16 %v793, %v781
        %v1154 = vpack.c.b16 %v794, %v782
        %v1155 = vpack.c.b16 %v795, %v783
        %v1156 = vpack.c.b16 %v796, %v784
        %v1157 = vpack.c.b16 %v797, %v785
        %v1158 = vpack.c.b16 %v798, %v786
        %v1159 = vpack.c.b16 %v799, %v787
        %v1160 = vpack.c.b16 %v800, %v788
        %v1161 = vpack.c.b16 %v801, %v789
        %v1162 = vpack.c.b16 %v802, %v790
        %v1163 = vpack.c.b16 %v803, %v791
        %v1164 = vpack.c.b16 %v816, %v804
        %v1165 = vpack.c.b16 %v817, %v805
        %v1166 = vpack.c.b16 %v818, %v806
        %v1167 = vpack.c.b16 %v819, %v807
        %v1168 = vpack.c.b16 %v820, %v808
        %v1169 = vpack.c.b16 %v821, %v809
        %v1170 = vpack.c.b16 %v822, %v810
        %v1171 = vpack.c.b16 %v823, %v811
        %v1172 = vpack.c.b16 %v824, %v812
        %v1173 = vpack.c.b16 %v825, %v813
        %v1174 = vpack.c.b16 %v826, %v814
        %v1175 = vpack.c.b16 %v827, %v815
        %v1176 = vpack.c.b16 %v840, %v828
        %v1177 = vpack.c.b16 %v841, %v829
        %v1178 = vpack.c.b16 %v842, %v830
        %v1179 = vpack.c.b16 %v843, %v831
        %v1180 = vpack.c.b16 %v844, %v832
        %v1181 = vpack.c.b16 %v845, %v833
        %v1182 = vpack.c.b16 %v846, %v834
        %v1183 = vpack.c.b16 %v847, %v835
        %v1184 = vpack.c.b16 %v848, %v836
        %v1185 = vpack.c.b16 %v849, %v837
        %v1186 = vpack.c.b16 %v850, %v838
        %v1187 = vpack.c.b16 %v851, %v839
        %v1188 = vpack.c.b16 %v864, %v852
        %v1189 = vpack.c.b16 %v865, %v853
        %v1190 = vpack.c.b16 %v866, %v854
        %v1191 = vpack.c.b16 %v867, %v855
        %v1192 = vpack.c.b16 %v868, %v856
        %v1193 = vpack.c.b16 %v869, %v857
        %v1194 = vpack.c.b16 %v870, %v858
        %v1195 = vpack.c.b16 %v871, %v859
        %v1196 = vpack.c.b16 %v872, %v860
        %v1197 = vpack.c.b16 %v873, %v861
        %v1198 = vpack.c.b16 %v874, %v862
        %v1199 = vpack.c.b16 %v875, %v863
        %v1200 = vpack.c.b16 %v888, %v876
        %v1201 = vpack.c.b16 %v889, %v877
        %v1202 = vpack.c.b16 %v890, %v878
        %v1203 = vpack.c.b16 %v891, %v879
        %v1204 = vpack.c.b16 %v892, %v880
        %v1205 = vpack.c.b16 %v893, %v881
        %v1206 = vpack.c.b16 %v894, %v882
        %v1207 = vpack.c.b16 %v895, %v883
        %v1208 = vpack.c.b16 %v896, %v884
        %v1209 = vpack.c.b16 %v897, %v885
        %v1210 = vpack.c.b16 %v898, %v886
        %v1211 = vpack.c.b16 %v899, %v887
        %v1212 = vpack.c.b16 %v912, %v900
        %v1213 = vpack.c.b16 %v913, %v901
        %v1214 = vpack.c.b16 %v914, %v902
        %v1215 = vpack.c.b16 %v915, %v903
        %v1216 = vpack.c.b16 %v916, %v904
        %v1217 = vpack.c.b16 %v917, %v905
        %v1218 = vpack.c.b16 %v918, %v906
        %v1219 = vpack.c.b16 %v919, %v907
        %v1220 = vpack.c.b16 %v920, %v908
        %v1221 = vpack.c.b16 %v921, %v909
        %v1222 = vpack.c.b16 %v922, %v910
        %v1223 = vpack.c.b16 %v923, %v911
        %v1224 = vpack.c.b16 %v936, %v924
        %v1225 = vpack.c.b16 %v937, %v925
        %v1226 = vpack.c.b16 %v938, %v926
        %v1227 = vpack.c.b16 %v939, %v927
        %v1228 = vpack.c.b16 %v940, %v928
        %v1229 = vpack.c.b16 %v941, %v929
        %v1230 = vpack.c.b16 %v942, %v930
        %v1231 = vpack.c.b16 %v943, %v931
        %v1232 = vpack.c.b16 %v944, %v932
        %v1233 = vpack.c.b16 %v945, %v933
        %v1234 = vpack.c.b16 %v946, %v934
        %v1235 = vpack.c.b16 %v947, %v935
        %v1236 = vpack.c.b16 %v960, %v948
        %v1237 = vpack.c.b16 %v961, %v949
        %v1238 = vpack.c.b16 %v962, %v950
        %v1239 = vpack.c.b16 %v963, %v951
        %v1240 = vpack.c.b16 %v964, %v952
        %v1241 = vpack.c.b16 %v965, %v953
        %v1242 = vpack.c.b16 %v966, %v954
        %v1243 = vpack.c.b16 %v967, %v955
        %v1244 = vpack.c.b16 %v968, %v956
        %v1245 = vpack.c.b16 %v969, %v957
        %v1246 = vpack.c.b16 %v970, %v958
        %v1247 = vpack.c.b16 %v971, %v959
        %v1248 = vpack.c.b16 %v984, %v972
        %v1249 = vpack.c.b16 %v985, %v973
        %v1250 = vpack.c.b16 %v986, %v974
        %v1251 = vpack.c.b16 %v987, %v975
        %v1252 = vpack.c.b16 %v988, %v976
        %v1253 = vpack.c.b16 %v989, %v977
        %v1254 = vpack.c.b16 %v990, %v978
        %v1255 = vpack.c.b16 %v991, %v979
        %v1256 = vpack.c.b16 %v992, %v980
        %v1257 = vpack.c.b16 %v993, %v981
        %v1258 = vpack.c.b16 %v994, %v982
        %v1259 = vpack.c.b16 %v995, %v983
        %v1260 = vpack.c.b16 %v1008, %v996
        %v1261 = vpack.c.b16 %v1009, %v997
        %v1262 = vpack.c.b16 %v1010, %v998
        %v1263 = vpack.c.b16 %v1011, %v999
        %v1264 = vpack.c.b16 %v1012, %v1000
        %v1265 = vpack.c.b16 %v1013, %v1001
        %v1266 = vpack.c.b16 %v1014, %v1002
        %v1267 = vpack.c.b16 %v1015, %v1003
        %v1268 = vpack.c.b16 %v1016, %v1004
        %v1269 = vpack.c.b16 %v1017, %v1005
        %v1270 = vpack.c.b16 %v1018, %v1006
        %v1271 = vpack.c.b16 %v1019, %v1007
        %v1272 = vpack.c.b16 %v1032, %v1020
        %v1273 = vpack.c.b16 %v1033, %v1021
        %v1274 = vpack.c.b16 %v1034, %v1022
        %v1275 = vpack.c.b16 %v1035, %v1023
        %v1276 = vpack.c.b16 %v1036, %v1024
        %v1277 = vpack.c.b16 %v1037, %v1025
        %v1278 = vpack.c.b16 %v1038, %v1026
        %v1279 = vpack.c.b16 %v1039, %v1027
        %v1280 = vpack.c.b16 %v1040, %v1028
        %v1281 = vpack.c.b16 %v1041, %v1029
        %v1282 = vpack.c.b16 %v1042, %v1030
        %v1283 = vpack.c.b16 %v1043, %v1031
        %v1284 = vpack.c.b16 %v1056, %v1044
        %v1285 = vpack.c.b16 %v1057, %v1045
        %v1286 = vpack.c.b16 %v1058, %v1046
        %v1287 = vpack.c.b16 %v1059, %v1047
        %v1288 = vpack.c.b16 %v1060, %v1048
        %v1289 = vpack.c.b16 %v1061, %v1049
        %v1290 = vpack.c.b16 %v1062, %v1050
        %v1291 = vpack.c.b16 %v1063, %v1051
        %v1292 = vpack.c.b16 %v1064, %v1052
        %v1293 = vpack.c.b16 %v1065, %v1053
        %v1294 = vpack.c.b16 %v1066, %v1054
        %v1295 = vpack.c.b16 %v1067, %v1055
        %v1296 = vpack.c.b16 %v1080, %v1068
        %v1297 = vpack.c.b16 %v1081, %v1069
        %v1298 = vpack.c.b16 %v1082, %v1070
        %v1299 = vpack.c.b16 %v1083, %v1071
        %v1300 = vpack.c.b16 %v1084, %v1072
        %v1301 = vpack.c.b16 %v1085, %v1073
        %v1302 = vpack.c.b16 %v1086, %v1074
        %v1303 = vpack.c.b16 %v1087, %v1075
        %v1304 = vpack.c.b16 %v1088, %v1076
        %v1305 = vpack.c.b16 %v1089, %v1077
        %v1306 = vpack.c.b16 %v1090, %v1078
        %v1307 = vpack.c.b16 %v1091, %v1079
        %v1308 = vpack.c.b16 %v1104, %v1092
        %v1309 = vpack.c.b16 %v1105, %v1093
        %v1310 = vpack.c.b16 %v1106, %v1094
        %v1311 = vpack.c.b16 %v1107, %v1095
        %v1312 = vpack.c.b16 %v1108, %v1096
        %v1313 = vpack.c.b16 %v1109, %v1097
        %v1314 = vpack.c.b16 %v1110, %v1098
        %v1315 = vpack.c.b16 %v1111, %v1099
        %v1316 = vpack.c.b16 %v1112, %v1100
        %v1317 = vpack.c.b16 %v1113, %v1101
        %v1318 = vpack.c.b16 %v1114, %v1102
        %v1319 = vpack.c.b16 %v1115, %v1103
        %v1320 = vpack.c.b16 %v1128, %v1116
        %v1321 = vpack.c.b16 %v1129, %v1117
        %v1322 = vpack.c.b16 %v1130, %v1118
        %v1323 = vpack.c.b16 %v1131, %v1119
        %v1324 = vpack.c.b16 %v1132, %v1120
        %v1325 = vpack.c.b16 %v1133, %v1121
        %v1326 = vpack.c.b16 %v1134, %v1122
        %v1327 = vpack.c.b16 %v1135, %v1123
        %v1328 = vpack.c.b16 %v1136, %v1124
        %v1329 = vpack.c.b16 %v1137, %v1125
        %v1330 = vpack.c.b16 %v1138, %v1126
        %v1331 = vpack.c.b16 %v1139, %v1127
        %1524 = vmatprep.subr.bf16.mxu0 %v1225
        %1525 = vmatpush1.bf16.msra.mxu0 %v1224
        %1526 = vmatprep.subr.bf16.mxu0 %v1213
        %1527 = vmatpush1.bf16.msra.mxu0 %v1212
        %1528 = vmatprep.subr.bf16.mxu0 %v1201
        %1529 = vmatpush1.bf16.msra.mxu0 %v1200
        %1530 = vmatprep.subr.bf16.mxu0 %v1189
        %1531 = vmatpush1.bf16.msra.mxu0 %v1188
        %1532 = vmatprep.subr.bf16.mxu0 %v1177
        %1533 = vmatpush1.bf16.msra.mxu0 %v1176
        %1534 = vmatprep.subr.bf16.mxu0 %v1165
        %1535 = vmatpush1.bf16.msra.mxu0 %v1164
        %1536 = vmatprep.subr.bf16.mxu0 %v1153
        %1537 = vmatpush1.bf16.msra.mxu0 %v1152
        %1538 = vmatprep.subr.bf16.mxu0 %v1141
        %1539 = vmatpush1.bf16.msra.mxu0 %v1140
        %1540 = vmatprep.subr.bf16.mxu0 %v1321
        %1541 = vmatpush2.bf16.msra.mxu0 %v1320
        %1542 = vmatprep.subr.bf16.mxu0 %v1309
        %1543 = vmatpush2.bf16.msra.mxu0 %v1308
        %1544 = vmatprep.subr.bf16.mxu0 %v1297
        %1545 = vmatpush2.bf16.msra.mxu0 %v1296
        %1546 = vmatprep.subr.bf16.mxu0 %v1285
        %1547 = vmatpush2.bf16.msra.mxu0 %v1284
        %1548 = vmatprep.subr.bf16.mxu0 %v1273
        %1549 = vmatpush2.bf16.msra.mxu0 %v1272
        %1550 = vmatprep.subr.bf16.mxu0 %v1261
        %1551 = vmatpush2.bf16.msra.mxu0 %v1260
        %1552 = vmatprep.subr.bf16.mxu0 %v1249
        %1553 = vmatpush2.bf16.msra.mxu0 %v1248
        %1554 = vmatprep.subr.bf16.mxu0 %v1237
        %1555 = vmatpush2.bf16.msra.mxu0 %v1236
        %1556 = vmatprep.mubr.bf16.mxu0 %v371
        %1557 = vmatmul.mubr.bf16.gmra.mxu0 %v370
        %v1558 = vpop.f32.mrf.mxu0
        %v1559 = vadd.f32 0.0, %v1558
        %v1560 = vpop.f32.mrf.mxu0
        %v1561 = vadd.f32 0.0, %v1560
        %v1562 = vpop.f32.mrf.mxu0
        %v1563 = vpop.f32.mrf.mxu0
        %1564 = vdwg.mxu0
        %1565 = vmatprep.subr.bf16.mxu0 %v1227
        %1566 = vmatpush1.bf16.msra.mxu0 %v1226
        %1567 = vmatprep.subr.bf16.mxu0 %v1215
        %1568 = vmatpush1.bf16.msra.mxu0 %v1214
        %1569 = vmatprep.subr.bf16.mxu0 %v1203
        %1570 = vmatpush1.bf16.msra.mxu0 %v1202
        %1571 = vmatprep.subr.bf16.mxu0 %v1191
        %1572 = vmatpush1.bf16.msra.mxu0 %v1190
        %1573 = vmatprep.subr.bf16.mxu0 %v1179
        %1574 = vmatpush1.bf16.msra.mxu0 %v1178
        %1575 = vmatprep.subr.bf16.mxu0 %v1167
        %1576 = vmatpush1.bf16.msra.mxu0 %v1166
        %1577 = vmatprep.subr.bf16.mxu0 %v1155
        %1578 = vmatpush1.bf16.msra.mxu0 %v1154
        %1579 = vmatprep.subr.bf16.mxu0 %v1143
        %1580 = vmatpush1.bf16.msra.mxu0 %v1142
        %1581 = vmatprep.subr.bf16.mxu0 %v1323
        %1582 = vmatpush2.bf16.msra.mxu0 %v1322
        %1583 = vmatprep.subr.bf16.mxu0 %v1311
        %1584 = vmatpush2.bf16.msra.mxu0 %v1310
        %1585 = vmatprep.subr.bf16.mxu0 %v1299
        %1586 = vmatpush2.bf16.msra.mxu0 %v1298
        %1587 = vmatprep.subr.bf16.mxu0 %v1287
        %1588 = vmatpush2.bf16.msra.mxu0 %v1286
        %1589 = vmatprep.subr.bf16.mxu0 %v1275
        %1590 = vmatpush2.bf16.msra.mxu0 %v1274
        %1591 = vmatprep.subr.bf16.mxu0 %v1263
        %1592 = vmatpush2.bf16.msra.mxu0 %v1262
        %1593 = vmatprep.subr.bf16.mxu0 %v1251
        %1594 = vmatpush2.bf16.msra.mxu0 %v1250
        %1595 = vmatprep.subr.bf16.mxu0 %v1239
        %1596 = vmatpush2.bf16.msra.mxu0 %v1238
        %1597 = vmatprep.mubr.bf16.mxu0 %v371
        %1598 = vmatmul.mubr.bf16.gmra.mxu0 %v370
        %v1599 = vpop.f32.mrf.mxu0
        %v1600 = vadd.f32 0.0, %v1599
        %v1601 = vpop.f32.mrf.mxu0
        %v1602 = vadd.f32 0.0, %v1601
        %v1603 = vpop.f32.mrf.mxu0
        %v1604 = vpop.f32.mrf.mxu0
        %1605 = vdwg.mxu0
        %1606 = vmatprep.subr.bf16.mxu0 %v1229
        %1607 = vmatpush1.bf16.msra.mxu0 %v1228
        %1608 = vmatprep.subr.bf16.mxu0 %v1217
        %1609 = vmatpush1.bf16.msra.mxu0 %v1216
        %1610 = vmatprep.subr.bf16.mxu0 %v1205
        %1611 = vmatpush1.bf16.msra.mxu0 %v1204
        %1612 = vmatprep.subr.bf16.mxu0 %v1193
        %1613 = vmatpush1.bf16.msra.mxu0 %v1192
        %1614 = vmatprep.subr.bf16.mxu0 %v1181
        %1615 = vmatpush1.bf16.msra.mxu0 %v1180
        %1616 = vmatprep.subr.bf16.mxu0 %v1169
        %1617 = vmatpush1.bf16.msra.mxu0 %v1168
        %1618 = vmatprep.subr.bf16.mxu0 %v1157
        %1619 = vmatpush1.bf16.msra.mxu0 %v1156
        %1620 = vmatprep.subr.bf16.mxu0 %v1145
        %1621 = vmatpush1.bf16.msra.mxu0 %v1144
        %1622 = vmatprep.subr.bf16.mxu0 %v1325
        %1623 = vmatpush2.bf16.msra.mxu0 %v1324
        %1624 = vmatprep.subr.bf16.mxu0 %v1313
        %1625 = vmatpush2.bf16.msra.mxu0 %v1312
        %1626 = vmatprep.subr.bf16.mxu0 %v1301
        %1627 = vmatpush2.bf16.msra.mxu0 %v1300
        %1628 = vmatprep.subr.bf16.mxu0 %v1289
        %1629 = vmatpush2.bf16.msra.mxu0 %v1288
        %1630 = vmatprep.subr.bf16.mxu0 %v1277
        %1631 = vmatpush2.bf16.msra.mxu0 %v1276
        %1632 = vmatprep.subr.bf16.mxu0 %v1265
        %1633 = vmatpush2.bf16.msra.mxu0 %v1264
        %1634 = vmatprep.subr.bf16.mxu0 %v1253
        %1635 = vmatpush2.bf16.msra.mxu0 %v1252
        %1636 = vmatprep.subr.bf16.mxu0 %v1241
        %1637 = vmatpush2.bf16.msra.mxu0 %v1240
        %1638 = vmatprep.mubr.bf16.mxu0 %v371
        %1639 = vmatmul.mubr.bf16.gmra.mxu0 %v370
        %v1640 = vpop.f32.mrf.mxu0
        %v1641 = vadd.f32 0.0, %v1640
        %v1642 = vpop.f32.mrf.mxu0
        %v1643 = vadd.f32 0.0, %v1642
        %v1644 = vpop.f32.mrf.mxu0
        %v1645 = vpop.f32.mrf.mxu0
        %1646 = vdwg.mxu0
        %1647 = vmatprep.subr.bf16.mxu0 %v1231
        %1648 = vmatpush1.bf16.msra.mxu0 %v1230
        %1649 = vmatprep.subr.bf16.mxu0 %v1219
        %1650 = vmatpush1.bf16.msra.mxu0 %v1218
        %1651 = vmatprep.subr.bf16.mxu0 %v1207
        %1652 = vmatpush1.bf16.msra.mxu0 %v1206
        %1653 = vmatprep.subr.bf16.mxu0 %v1195
        %1654 = vmatpush1.bf16.msra.mxu0 %v1194
        %1655 = vmatprep.subr.bf16.mxu0 %v1183
        %1656 = vmatpush1.bf16.msra.mxu0 %v1182
        %1657 = vmatprep.subr.bf16.mxu0 %v1171
        %1658 = vmatpush1.bf16.msra.mxu0 %v1170
        %1659 = vmatprep.subr.bf16.mxu0 %v1159
        %1660 = vmatpush1.bf16.msra.mxu0 %v1158
        %1661 = vmatprep.subr.bf16.mxu0 %v1147
        %1662 = vmatpush1.bf16.msra.mxu0 %v1146
        %1663 = vmatprep.subr.bf16.mxu0 %v1327
        %1664 = vmatpush2.bf16.msra.mxu0 %v1326
        %1665 = vmatprep.subr.bf16.mxu0 %v1315
        %1666 = vmatpush2.bf16.msra.mxu0 %v1314
        %1667 = vmatprep.subr.bf16.mxu0 %v1303
        %1668 = vmatpush2.bf16.msra.mxu0 %v1302
        %1669 = vmatprep.subr.bf16.mxu0 %v1291
        %1670 = vmatpush2.bf16.msra.mxu0 %v1290
        %1671 = vmatprep.subr.bf16.mxu0 %v1279
        %1672 = vmatpush2.bf16.msra.mxu0 %v1278
        %1673 = vmatprep.subr.bf16.mxu0 %v1267
        %1674 = vmatpush2.bf16.msra.mxu0 %v1266
        %1675 = vmatprep.subr.bf16.mxu0 %v1255
        %1676 = vmatpush2.bf16.msra.mxu0 %v1254
        %1677 = vmatprep.subr.bf16.mxu0 %v1243
        %1678 = vmatpush2.bf16.msra.mxu0 %v1242
        %1679 = vmatprep.mubr.bf16.mxu0 %v371
        %1680 = vmatmul.mubr.bf16.gmra.mxu0 %v370
        %v1681 = vpop.f32.mrf.mxu0
        %v1682 = vadd.f32 0.0, %v1681
        %v1683 = vpop.f32.mrf.mxu0
        %v1684 = vadd.f32 0.0, %v1683
        %v1685 = vpop.f32.mrf.mxu0
        %v1686 = vpop.f32.mrf.mxu0
        %1687 = vdwg.mxu0
        %1688 = vmatprep.subr.bf16.mxu0 %v1233
        %1689 = vmatpush1.bf16.msra.mxu0 %v1232
        %1690 = vmatprep.subr.bf16.mxu0 %v1221
        %1691 = vmatpush1.bf16.msra.mxu0 %v1220
        %1692 = vmatprep.subr.bf16.mxu0 %v1209
        %1693 = vmatpush1.bf16.msra.mxu0 %v1208
        %1694 = vmatprep.subr.bf16.mxu0 %v1197
        %1695 = vmatpush1.bf16.msra.mxu0 %v1196
        %1696 = vmatprep.subr.bf16.mxu0 %v1185
        %1697 = vmatpush1.bf16.msra.mxu0 %v1184
        %1698 = vmatprep.subr.bf16.mxu0 %v1173
        %1699 = vmatpush1.bf16.msra.mxu0 %v1172
        %1700 = vmatprep.subr.bf16.mxu0 %v1161
        %1701 = vmatpush1.bf16.msra.mxu0 %v1160
        %1702 = vmatprep.subr.bf16.mxu0 %v1149
        %1703 = vmatpush1.bf16.msra.mxu0 %v1148
        %1704 = vmatprep.subr.bf16.mxu0 %v1329
        %1705 = vmatpush2.bf16.msra.mxu0 %v1328
        %1706 = vmatprep.subr.bf16.mxu0 %v1317
        %1707 = vmatpush2.bf16.msra.mxu0 %v1316
        %1708 = vmatprep.subr.bf16.mxu0 %v1305
        %1709 = vmatpush2.bf16.msra.mxu0 %v1304
        %1710 = vmatprep.subr.bf16.mxu0 %v1293
        %1711 = vmatpush2.bf16.msra.mxu0 %v1292
        %1712 = vmatprep.subr.bf16.mxu0 %v1281
        %1713 = vmatpush2.bf16.msra.mxu0 %v1280
        %1714 = vmatprep.subr.bf16.mxu0 %v1269
        %1715 = vmatpush2.bf16.msra.mxu0 %v1268
        %1716 = vmatprep.subr.bf16.mxu0 %v1257
        %1717 = vmatpush2.bf16.msra.mxu0 %v1256
        %1718 = vmatprep.subr.bf16.mxu0 %v1245
        %1719 = vmatpush2.bf16.msra.mxu0 %v1244
        %1720 = vmatprep.mubr.bf16.mxu0 %v371
        %1721 = vmatmul.mubr.bf16.gmra.mxu0 %v370
        %v1722 = vpop.f32.mrf.mxu0
        %v1723 = vadd.f32 0.0, %v1722
        %v1724 = vpop.f32.mrf.mxu0
        %v1725 = vadd.f32 0.0, %v1724
        %v1726 = vpop.f32.mrf.mxu0
        %v1727 = vpop.f32.mrf.mxu0
        %1728 = vdwg.mxu0
        %1729 = vmatprep.subr.bf16.mxu0 %v1235
        %1730 = vmatpush1.bf16.msra.mxu0 %v1234
        %1731 = vmatprep.subr.bf16.mxu0 %v1223
        %1732 = vmatpush1.bf16.msra.mxu0 %v1222
        %1733 = vmatprep.subr.bf16.mxu0 %v1211
        %1734 = vmatpush1.bf16.msra.mxu0 %v1210
        %1735 = vmatprep.subr.bf16.mxu0 %v1199
        %1736 = vmatpush1.bf16.msra.mxu0 %v1198
        %1737 = vmatprep.subr.bf16.mxu0 %v1187
        %1738 = vmatpush1.bf16.msra.mxu0 %v1186
        %1739 = vmatprep.subr.bf16.mxu0 %v1175
        %1740 = vmatpush1.bf16.msra.mxu0 %v1174
        %1741 = vmatprep.subr.bf16.mxu0 %v1163
        %1742 = vmatpush1.bf16.msra.mxu0 %v1162
        %1743 = vmatprep.subr.bf16.mxu0 %v1151
        %1744 = vmatpush1.bf16.msra.mxu0 %v1150
        %1745 = vmatprep.subr.bf16.mxu0 %v1331
        %1746 = vmatpush2.bf16.msra.mxu0 %v1330
        %1747 = vmatprep.subr.bf16.mxu0 %v1319
        %1748 = vmatpush2.bf16.msra.mxu0 %v1318
        %1749 = vmatprep.subr.bf16.mxu0 %v1307
        %1750 = vmatpush2.bf16.msra.mxu0 %v1306
        %1751 = vmatprep.subr.bf16.mxu0 %v1295
        %1752 = vmatpush2.bf16.msra.mxu0 %v1294
        %1753 = vmatprep.subr.bf16.mxu0 %v1283
        %1754 = vmatpush2.bf16.msra.mxu0 %v1282
        %1755 = vmatprep.subr.bf16.mxu0 %v1271
        %1756 = vmatpush2.bf16.msra.mxu0 %v1270
        %1757 = vmatprep.subr.bf16.mxu0 %v1259
        %1758 = vmatpush2.bf16.msra.mxu0 %v1258
        %1759 = vmatprep.subr.bf16.mxu0 %v1247
        %1760 = vmatpush2.bf16.msra.mxu0 %v1246
        %1761 = vmatprep.mubr.bf16.mxu0 %v371
        %1762 = vmatmul.mubr.bf16.gmra.mxu0 %v370
        %v1763 = vpop.f32.mrf.mxu0
        %v1764 = vadd.f32 0.0, %v1763
        %v1765 = vpop.f32.mrf.mxu0
        %v1766 = vadd.f32 0.0, %v1765
        %v1767 = vpop.f32.mrf.mxu0
        %v1768 = vpop.f32.mrf.mxu0
        %1769 = vdwg.mxu0
        %v1770 = vld [vmem:[%s3] sm:$0x3f]
        %v1772 = vlaneseq
        %v1773 = vshrl.u32 %v1772, 7
        %v1774 = vsub.s32 0, %v1773
        %v1775 = vrot.slane %v1770, %v1774
        %v1776 = vlaneseq
        %v1777 = vshrl.u32 %v1776, 7
        %v1778 = vsub.s32 1, %v1777
        %v1779 = vrot.slane %v1770, %v1778
        %v1780 = vlaneseq
        %v1781 = vshrl.u32 %v1780, 7
        %v1782 = vsub.s32 2, %v1781
        %v1783 = vrot.slane %v1770, %v1782
        %v1784 = vlaneseq
        %v1785 = vshrl.u32 %v1784, 7
        %v1786 = vsub.s32 3, %v1785
        %v1787 = vrot.slane %v1770, %v1786
        %v1788 = vlaneseq
        %v1789 = vshrl.u32 %v1788, 7
        %v1790 = vsub.s32 4, %v1789
        %v1791 = vrot.slane %v1770, %v1790
        %v1792 = vlaneseq
        %v1793 = vshrl.u32 %v1792, 7
        %v1794 = vsub.s32 5, %v1793
        %v1795 = vrot.slane %v1770, %v1794
        %v1802 = vadd.f32 %v1559, %v1775
        %v1803 = vadd.f32 %v1561, %v1779
        %v1804 = vadd.f32 %v1600, %v1783
        %v1805 = vadd.f32 %v1602, %v1787
        %v1806 = vadd.f32 %v1641, %v1791
        %v1807 = vadd.f32 %v1643, %v1795
        %v1808 = vld [vmem:[%s4] sm:$0x3f]
        %v1810 = vlaneseq
        %v1811 = vshrl.u32 %v1810, 7
        %v1812 = vsub.s32 0, %v1811
        %v1813 = vrot.slane %v1808, %v1812
        %v1814 = vlaneseq
        %v1815 = vshrl.u32 %v1814, 7
        %v1816 = vsub.s32 1, %v1815
        %v1817 = vrot.slane %v1808, %v1816
        %v1818 = vlaneseq
        %v1819 = vshrl.u32 %v1818, 7
        %v1820 = vsub.s32 2, %v1819
        %v1821 = vrot.slane %v1808, %v1820
        %v1822 = vlaneseq
        %v1823 = vshrl.u32 %v1822, 7
        %v1824 = vsub.s32 3, %v1823
        %v1825 = vrot.slane %v1808, %v1824
        %v1826 = vlaneseq
        %v1827 = vshrl.u32 %v1826, 7
        %v1828 = vsub.s32 4, %v1827
        %v1829 = vrot.slane %v1808, %v1828
        %v1830 = vlaneseq
        %v1831 = vshrl.u32 %v1830, 7
        %v1832 = vsub.s32 5, %v1831
        %v1833 = vrot.slane %v1808, %v1832
        %v1840 = vadd.f32 %v1682, %v1813
        %v1841 = vadd.f32 %v1684, %v1817
        %v1842 = vadd.f32 %v1723, %v1821
        %v1843 = vadd.f32 %v1725, %v1825
        %v1844 = vadd.f32 %v1764, %v1829
        %v1845 = vadd.f32 %v1766, %v1833
        %v1848 = vrot.slane %v1840, 1
        %v1849 = vrot.slane %v1841, 1
        %v1852 = vadd.f32 %v1802, %v1848
        %v1853 = vadd.f32 %v1803, %v1849
        %v1854 = vxor.u32 %v1852, 2147483648
        %v1855 = vxor.u32 %v1853, 2147483648
        %v1856 = vmul.f32 %v1854, 1.442695
        %v1857 = vpow.pop %v1856
        %v1858 = vmul.f32 %v1855, 1.442695
        %v1859 = vpow.pop %v1858
        %v1860 = vadd.f32 %v1857, 1.0
        %v1861 = vadd.f32 %v1859, 1.0
        %v1862 = vrcp.pop %v1860
        %v1863 = vmul.f32 1.0, %v1862
        %v1864 = vrcp.pop %v1861
        %v1865 = vmul.f32 1.0, %v1864
        %v1868 = vrot.slane %v1842, 1
        %v1869 = vrot.slane %v1843, 1
        %v1872 = vadd.f32 %v1804, %v1868
        %v1873 = vadd.f32 %v1805, %v1869
        %v1874 = vxor.u32 %v1872, 2147483648
        %v1875 = vxor.u32 %v1873, 2147483648
        %v1876 = vmul.f32 %v1874, 1.442695
        %v1877 = vpow.pop %v1876
        %v1878 = vmul.f32 %v1875, 1.442695
        %v1879 = vpow.pop %v1878
        %v1880 = vadd.f32 %v1877, 1.0
        %v1881 = vadd.f32 %v1879, 1.0
        %v1882 = vrcp.pop %v1880
        %v1883 = vmul.f32 1.0, %v1882
        %v1884 = vrcp.pop %v1881
        %v1885 = vmul.f32 1.0, %v1884
        %v1888 = vrot.slane %v1844, 1
        %v1889 = vrot.slane %v1845, 1
        %v1892 = vmul.f32 %v1863, %v1888
        %v1893 = vmul.f32 %v1865, %v1889
        %v1894 = vadd.f32 %v1806, %v1892
        %v1895 = vadd.f32 %v1807, %v1893
        %v1896 = vtanh.pop %v1894
        %v1897 = vtanh.pop %v1895
        %v1898 = vsub.f32 1.0, %v1883
        %v1899 = vsub.f32 1.0, %v1885
        %v1900 = vmul.f32 %v1898, %v1896
        %v1901 = vmul.f32 %v1899, %v1897
        %v1902 = vmul.f32 %v1883, %v360
        %v1903 = vmul.f32 %v1885, %v364
        %v1904 = vadd.f32 %v1900, %v1902
        %v1905 = vadd.f32 %v1901, %v1903
        %v1908 = vcombine.low %v1904, %v1905
        %v1910 = vunpack.c.l.s4 1966171168
        %v1911 = vunpack.c.0.s8 %v1910
        %v1912 = vlaneseq
        %v1913 = vshrl.u32 %v1912, 7
        %v1914 = vsub.s32 %v1911, %v1913
        %v1915 = vrot.slane %v1908, %v1914
        %v1917 = vunpack.c.l.s4 1966171168
        %v1918 = vunpack.c.0.s8 %v1917
        %v1919 = vlaneseq
        %v1920 = vshrl.u32 %v1919, 7
        %v1921 = vsub.s32 %v1918, %v1920
        %v1922 = vrot.slane %v1915, %v1921
        %v1924 = vlaneseq
        %vm1925 = vcmp.ge.s32.totalorder %v1924, 0
        %vm1926 = vcmp.lt.s32.totalorder %v1924, 256
        %vm1927 = vmand %vm1925, %vm1926
        %1928 = vst.msk [vmem:[#allocation8] sm:$0x3] %vm1927, %v1922
        %v1929 = vpack.c.bf16 %v1904, %v1904
        %v1930 = vpack.c.bf16 %v1905, %v1905
        %v1931 = vld [vmem:[#allocation5] sm:$0xff]
        %v1932 = vld [vmem:[#allocation5 + $0x8] sm:$0xff]
        %v1933 = vld [vmem:[#allocation5 + $0x10] sm:$0xff]
        %v1934 = vld [vmem:[#allocation5 + $0x18] sm:$0xff]
        %v1935 = vld [vmem:[#allocation5 + $0x20] sm:$0xff]
        %v1936 = vld [vmem:[#allocation5 + $0x28] sm:$0xff]
        %v1937 = vld [vmem:[#allocation5 + $0x30] sm:$0xff]
        %v1938 = vld [vmem:[#allocation5 + $0x38] sm:$0xff]
        %v1939 = vld [vmem:[#allocation5 + $0x40] sm:$0xff]
        %v1940 = vld [vmem:[#allocation5 + $0x48] sm:$0xff]
        %v1941 = vld [vmem:[#allocation5 + $0x50] sm:$0xff]
        %v1942 = vld [vmem:[#allocation5 + $0x58] sm:$0xff]
        %v1943 = vld [vmem:[#allocation5 + $0x60] sm:$0xff]
        %v1944 = vld [vmem:[#allocation5 + $0x68] sm:$0xff]
        %v1945 = vld [vmem:[#allocation5 + $0x70] sm:$0xff]
        %v1946 = vld [vmem:[#allocation5 + $0x78] sm:$0xff]
        %v1947 = vld [vmem:[#allocation5 + $0x80] sm:$0xff]
        %v1948 = vld [vmem:[#allocation5 + $0x88] sm:$0xff]
        %v1949 = vld [vmem:[#allocation5 + $0x90] sm:$0xff]
        %v1950 = vld [vmem:[#allocation5 + $0x98] sm:$0xff]
        %v1951 = vld [vmem:[#allocation5 + $0xa0] sm:$0xff]
        %v1952 = vld [vmem:[#allocation5 + $0xa8] sm:$0xff]
        %v1953 = vld [vmem:[#allocation5 + $0xb0] sm:$0xff]
        %v1954 = vld [vmem:[#allocation5 + $0xb8] sm:$0xff]
        %v1955 = vld [vmem:[#allocation5 + $0xc0] sm:$0xff]
        %v1956 = vld [vmem:[#allocation5 + $0xc8] sm:$0xff]
        %v1957 = vld [vmem:[#allocation5 + $0xd0] sm:$0xff]
        %v1958 = vld [vmem:[#allocation5 + $0xd8] sm:$0xff]
        %v1959 = vld [vmem:[#allocation5 + $0xe0] sm:$0xff]
        %v1960 = vld [vmem:[#allocation5 + $0xe8] sm:$0xff]
        %v1961 = vld [vmem:[#allocation5 + $0xf0] sm:$0xff]
        %v1962 = vld [vmem:[#allocation5 + $0xf8] sm:$0xff]
        %v1963 = vld [vmem:[#allocation5 + $0x100] sm:$0xff]
        %v1964 = vld [vmem:[#allocation5 + $0x108] sm:$0xff]
        %v1965 = vld [vmem:[#allocation5 + $0x110] sm:$0xff]
        %v1966 = vld [vmem:[#allocation5 + $0x118] sm:$0xff]
        %v1967 = vld [vmem:[#allocation5 + $0x120] sm:$0xff]
        %v1968 = vld [vmem:[#allocation5 + $0x128] sm:$0xff]
        %v1969 = vld [vmem:[#allocation5 + $0x130] sm:$0xff]
        %v1970 = vld [vmem:[#allocation5 + $0x138] sm:$0xff]
        %v1971 = vld [vmem:[#allocation5 + $0x140] sm:$0xff]
        %v1972 = vld [vmem:[#allocation5 + $0x148] sm:$0xff]
        %v1973 = vld [vmem:[#allocation5 + $0x150] sm:$0xff]
        %v1974 = vld [vmem:[#allocation5 + $0x158] sm:$0xff]
        %v1975 = vld [vmem:[#allocation5 + $0x160] sm:$0xff]
        %v1976 = vld [vmem:[#allocation5 + $0x168] sm:$0xff]
        %v1977 = vld [vmem:[#allocation5 + $0x170] sm:$0xff]
        %v1978 = vld [vmem:[#allocation5 + $0x178] sm:$0xff]
        %v1979 = vld [vmem:[#allocation5 + $0x180] sm:$0xff]
        %v1980 = vld [vmem:[#allocation5 + $0x188] sm:$0xff]
        %v1981 = vld [vmem:[#allocation5 + $0x190] sm:$0xff]
        %v1982 = vld [vmem:[#allocation5 + $0x198] sm:$0xff]
        %v1983 = vld [vmem:[#allocation5 + $0x1a0] sm:$0xff]
        %v1984 = vld [vmem:[#allocation5 + $0x1a8] sm:$0xff]
        %v1985 = vld [vmem:[#allocation5 + $0x1b0] sm:$0xff]
        %v1986 = vld [vmem:[#allocation5 + $0x1b8] sm:$0xff]
        %v1987 = vld [vmem:[#allocation5 + $0x1c0] sm:$0xff]
        %v1988 = vld [vmem:[#allocation5 + $0x1c8] sm:$0xff]
        %v1989 = vld [vmem:[#allocation5 + $0x1d0] sm:$0xff]
        %v1990 = vld [vmem:[#allocation5 + $0x1d8] sm:$0xff]
        %v1991 = vld [vmem:[#allocation5 + $0x1e0] sm:$0xff]
        %v1992 = vld [vmem:[#allocation5 + $0x1e8] sm:$0xff]
        %v1993 = vld [vmem:[#allocation5 + $0x1f0] sm:$0xff]
        %v1994 = vld [vmem:[#allocation5 + $0x1f8] sm:$0xff]
        %v1995 = vld [vmem:[%s6] sm:$0xf]
        %v2060 = vunpack.c.l.b16 %v1931
        %v2061 = vunpack.c.h.b16 %v1931
        %v2062 = vunpack.c.l.b16 %v1932
        %v2063 = vunpack.c.h.b16 %v1932
        %v2064 = vunpack.c.l.b16 %v1933
        %v2065 = vunpack.c.h.b16 %v1933
        %v2066 = vunpack.c.l.b16 %v1934
        %v2067 = vunpack.c.h.b16 %v1934
        %v2068 = vunpack.c.l.b16 %v1935
        %v2069 = vunpack.c.h.b16 %v1935
        %v2070 = vunpack.c.l.b16 %v1936
        %v2071 = vunpack.c.h.b16 %v1936
        %v2072 = vunpack.c.l.b16 %v1937
        %v2073 = vunpack.c.h.b16 %v1937
        %v2074 = vunpack.c.l.b16 %v1938
        %v2075 = vunpack.c.h.b16 %v1938
        %v2076 = vunpack.c.l.b16 %v1939
        %v2077 = vunpack.c.h.b16 %v1939
        %v2078 = vunpack.c.l.b16 %v1940
        %v2079 = vunpack.c.h.b16 %v1940
        %v2080 = vunpack.c.l.b16 %v1941
        %v2081 = vunpack.c.h.b16 %v1941
        %v2082 = vunpack.c.l.b16 %v1942
        %v2083 = vunpack.c.h.b16 %v1942
        %v2084 = vunpack.c.l.b16 %v1943
        %v2085 = vunpack.c.h.b16 %v1943
        %v2086 = vunpack.c.l.b16 %v1944
        %v2087 = vunpack.c.h.b16 %v1944
        %v2088 = vunpack.c.l.b16 %v1945
        %v2089 = vunpack.c.h.b16 %v1945
        %v2090 = vunpack.c.l.b16 %v1946
        %v2091 = vunpack.c.h.b16 %v1946
        %v2092 = vunpack.c.l.b16 %v1947
        %v2093 = vunpack.c.h.b16 %v1947
        %v2094 = vunpack.c.l.b16 %v1948
        %v2095 = vunpack.c.h.b16 %v1948
        %v2096 = vunpack.c.l.b16 %v1949
        %v2097 = vunpack.c.h.b16 %v1949
        %v2098 = vunpack.c.l.b16 %v1950
        %v2099 = vunpack.c.h.b16 %v1950
        %v2100 = vunpack.c.l.b16 %v1951
        %v2101 = vunpack.c.h.b16 %v1951
        %v2102 = vunpack.c.l.b16 %v1952
        %v2103 = vunpack.c.h.b16 %v1952
        %v2104 = vunpack.c.l.b16 %v1953
        %v2105 = vunpack.c.h.b16 %v1953
        %v2106 = vunpack.c.l.b16 %v1954
        %v2107 = vunpack.c.h.b16 %v1954
        %v2108 = vunpack.c.l.b16 %v1955
        %v2109 = vunpack.c.h.b16 %v1955
        %v2110 = vunpack.c.l.b16 %v1956
        %v2111 = vunpack.c.h.b16 %v1956
        %v2112 = vunpack.c.l.b16 %v1957
        %v2113 = vunpack.c.h.b16 %v1957
        %v2114 = vunpack.c.l.b16 %v1958
        %v2115 = vunpack.c.h.b16 %v1958
        %v2116 = vunpack.c.l.b16 %v1959
        %v2117 = vunpack.c.h.b16 %v1959
        %v2118 = vunpack.c.l.b16 %v1960
        %v2119 = vunpack.c.h.b16 %v1960
        %v2120 = vunpack.c.l.b16 %v1961
        %v2121 = vunpack.c.h.b16 %v1961
        %v2122 = vunpack.c.l.b16 %v1962
        %v2123 = vunpack.c.h.b16 %v1962
        %v2124 = vunpack.c.l.b16 %v1963
        %v2125 = vunpack.c.h.b16 %v1963
        %v2126 = vunpack.c.l.b16 %v1964
        %v2127 = vunpack.c.h.b16 %v1964
        %v2128 = vunpack.c.l.b16 %v1965
        %v2129 = vunpack.c.h.b16 %v1965
        %v2130 = vunpack.c.l.b16 %v1966
        %v2131 = vunpack.c.h.b16 %v1966
        %v2132 = vunpack.c.l.b16 %v1967
        %v2133 = vunpack.c.h.b16 %v1967
        %v2134 = vunpack.c.l.b16 %v1968
        %v2135 = vunpack.c.h.b16 %v1968
        %v2136 = vunpack.c.l.b16 %v1969
        %v2137 = vunpack.c.h.b16 %v1969
        %v2138 = vunpack.c.l.b16 %v1970
        %v2139 = vunpack.c.h.b16 %v1970
        %v2140 = vunpack.c.l.b16 %v1971
        %v2141 = vunpack.c.h.b16 %v1971
        %v2142 = vunpack.c.l.b16 %v1972
        %v2143 = vunpack.c.h.b16 %v1972
        %v2144 = vunpack.c.l.b16 %v1973
        %v2145 = vunpack.c.h.b16 %v1973
        %v2146 = vunpack.c.l.b16 %v1974
        %v2147 = vunpack.c.h.b16 %v1974
        %v2148 = vunpack.c.l.b16 %v1975
        %v2149 = vunpack.c.h.b16 %v1975
        %v2150 = vunpack.c.l.b16 %v1976
        %v2151 = vunpack.c.h.b16 %v1976
        %v2152 = vunpack.c.l.b16 %v1977
        %v2153 = vunpack.c.h.b16 %v1977
        %v2154 = vunpack.c.l.b16 %v1978
        %v2155 = vunpack.c.h.b16 %v1978
        %v2156 = vunpack.c.l.b16 %v1979
        %v2157 = vunpack.c.h.b16 %v1979
        %v2158 = vunpack.c.l.b16 %v1980
        %v2159 = vunpack.c.h.b16 %v1980
        %v2160 = vunpack.c.l.b16 %v1981
        %v2161 = vunpack.c.h.b16 %v1981
        %v2162 = vunpack.c.l.b16 %v1982
        %v2163 = vunpack.c.h.b16 %v1982
        %v2164 = vunpack.c.l.b16 %v1983
        %v2165 = vunpack.c.h.b16 %v1983
        %v2166 = vunpack.c.l.b16 %v1984
        %v2167 = vunpack.c.h.b16 %v1984
        %v2168 = vunpack.c.l.b16 %v1985
        %v2169 = vunpack.c.h.b16 %v1985
        %v2170 = vunpack.c.l.b16 %v1986
        %v2171 = vunpack.c.h.b16 %v1986
        %v2172 = vunpack.c.l.b16 %v1987
        %v2173 = vunpack.c.h.b16 %v1987
        %v2174 = vunpack.c.l.b16 %v1988
        %v2175 = vunpack.c.h.b16 %v1988
        %v2176 = vunpack.c.l.b16 %v1989
        %v2177 = vunpack.c.h.b16 %v1989
        %v2178 = vunpack.c.l.b16 %v1990
        %v2179 = vunpack.c.h.b16 %v1990
        %v2180 = vunpack.c.l.b16 %v1991
        %v2181 = vunpack.c.h.b16 %v1991
        %v2182 = vunpack.c.l.b16 %v1992
        %v2183 = vunpack.c.h.b16 %v1992
        %v2184 = vunpack.c.l.b16 %v1993
        %v2185 = vunpack.c.h.b16 %v1993
        %v2186 = vunpack.c.l.b16 %v1994
        %v2187 = vunpack.c.h.b16 %v1994
        %v2188 = vpack.c.b16 %v2064, %v2060
        %v2189 = vpack.c.b16 %v2065, %v2061
        %v2190 = vpack.c.b16 %v2066, %v2062
        %v2191 = vpack.c.b16 %v2067, %v2063
        %v2192 = vpack.c.b16 %v2072, %v2068
        %v2193 = vpack.c.b16 %v2073, %v2069
        %v2194 = vpack.c.b16 %v2074, %v2070
        %v2195 = vpack.c.b16 %v2075, %v2071
        %v2196 = vpack.c.b16 %v2080, %v2076
        %v2197 = vpack.c.b16 %v2081, %v2077
        %v2198 = vpack.c.b16 %v2082, %v2078
        %v2199 = vpack.c.b16 %v2083, %v2079
        %v2200 = vpack.c.b16 %v2088, %v2084
        %v2201 = vpack.c.b16 %v2089, %v2085
        %v2202 = vpack.c.b16 %v2090, %v2086
        %v2203 = vpack.c.b16 %v2091, %v2087
        %v2204 = vpack.c.b16 %v2096, %v2092
        %v2205 = vpack.c.b16 %v2097, %v2093
        %v2206 = vpack.c.b16 %v2098, %v2094
        %v2207 = vpack.c.b16 %v2099, %v2095
        %v2208 = vpack.c.b16 %v2104, %v2100
        %v2209 = vpack.c.b16 %v2105, %v2101
        %v2210 = vpack.c.b16 %v2106, %v2102
        %v2211 = vpack.c.b16 %v2107, %v2103
        %v2212 = vpack.c.b16 %v2112, %v2108
        %v2213 = vpack.c.b16 %v2113, %v2109
        %v2214 = vpack.c.b16 %v2114, %v2110
        %v2215 = vpack.c.b16 %v2115, %v2111
        %v2216 = vpack.c.b16 %v2120, %v2116
        %v2217 = vpack.c.b16 %v2121, %v2117
        %v2218 = vpack.c.b16 %v2122, %v2118
        %v2219 = vpack.c.b16 %v2123, %v2119
        %v2220 = vpack.c.b16 %v2128, %v2124
        %v2221 = vpack.c.b16 %v2129, %v2125
        %v2222 = vpack.c.b16 %v2130, %v2126
        %v2223 = vpack.c.b16 %v2131, %v2127
        %v2224 = vpack.c.b16 %v2136, %v2132
        %v2225 = vpack.c.b16 %v2137, %v2133
        %v2226 = vpack.c.b16 %v2138, %v2134
        %v2227 = vpack.c.b16 %v2139, %v2135
        %v2228 = vpack.c.b16 %v2144, %v2140
        %v2229 = vpack.c.b16 %v2145, %v2141
        %v2230 = vpack.c.b16 %v2146, %v2142
        %v2231 = vpack.c.b16 %v2147, %v2143
        %v2232 = vpack.c.b16 %v2152, %v2148
        %v2233 = vpack.c.b16 %v2153, %v2149
        %v2234 = vpack.c.b16 %v2154, %v2150
        %v2235 = vpack.c.b16 %v2155, %v2151
        %v2236 = vpack.c.b16 %v2160, %v2156
        %v2237 = vpack.c.b16 %v2161, %v2157
        %v2238 = vpack.c.b16 %v2162, %v2158
        %v2239 = vpack.c.b16 %v2163, %v2159
        %v2240 = vpack.c.b16 %v2168, %v2164
        %v2241 = vpack.c.b16 %v2169, %v2165
        %v2242 = vpack.c.b16 %v2170, %v2166
        %v2243 = vpack.c.b16 %v2171, %v2167
        %v2244 = vpack.c.b16 %v2176, %v2172
        %v2245 = vpack.c.b16 %v2177, %v2173
        %v2246 = vpack.c.b16 %v2178, %v2174
        %v2247 = vpack.c.b16 %v2179, %v2175
        %v2248 = vpack.c.b16 %v2184, %v2180
        %v2249 = vpack.c.b16 %v2185, %v2181
        %v2250 = vpack.c.b16 %v2186, %v2182
        %v2251 = vpack.c.b16 %v2187, %v2183
        %v2317 = vlaneseq
        %v2318 = vshrl.u32 %v2317, 7
        %v2319 = vsub.s32 0, %v2318
        %v2320 = vrot.slane %v1995, %v2319
        %v2321 = vlaneseq
        %v2322 = vshrl.u32 %v2321, 7
        %v2323 = vsub.s32 1, %v2322
        %v2324 = vrot.slane %v1995, %v2323
        %v2325 = vlaneseq
        %v2326 = vshrl.u32 %v2325, 7
        %v2327 = vsub.s32 2, %v2326
        %v2328 = vrot.slane %v1995, %v2327
        %v2329 = vlaneseq
        %v2330 = vshrl.u32 %v2329, 7
        %v2331 = vsub.s32 3, %v2330
        %v2332 = vrot.slane %v1995, %v2331
        %2337 = vmatprep.subr.bf16.mxu0 %v2217
        %2338 = vmatpush1.bf16.msra.mxu0 %v2216
        %2339 = vmatprep.subr.bf16.mxu0 %v2213
        %2340 = vmatpush1.bf16.msra.mxu0 %v2212
        %2341 = vmatprep.subr.bf16.mxu0 %v2209
        %2342 = vmatpush1.bf16.msra.mxu0 %v2208
        %2343 = vmatprep.subr.bf16.mxu0 %v2205
        %2344 = vmatpush1.bf16.msra.mxu0 %v2204
        %2345 = vmatprep.subr.bf16.mxu0 %v2201
        %2346 = vmatpush1.bf16.msra.mxu0 %v2200
        %2347 = vmatprep.subr.bf16.mxu0 %v2197
        %2348 = vmatpush1.bf16.msra.mxu0 %v2196
        %2349 = vmatprep.subr.bf16.mxu0 %v2193
        %2350 = vmatpush1.bf16.msra.mxu0 %v2192
        %2351 = vmatprep.subr.bf16.mxu0 %v2189
        %2352 = vmatpush1.bf16.msra.mxu0 %v2188
        %2353 = vmatprep.subr.bf16.mxu0 %v2249
        %2354 = vmatpush2.bf16.msra.mxu0 %v2248
        %2355 = vmatprep.subr.bf16.mxu0 %v2245
        %2356 = vmatpush2.bf16.msra.mxu0 %v2244
        %2357 = vmatprep.subr.bf16.mxu0 %v2241
        %2358 = vmatpush2.bf16.msra.mxu0 %v2240
        %2359 = vmatprep.subr.bf16.mxu0 %v2237
        %2360 = vmatpush2.bf16.msra.mxu0 %v2236
        %2361 = vmatprep.subr.bf16.mxu0 %v2233
        %2362 = vmatpush2.bf16.msra.mxu0 %v2232
        %2363 = vmatprep.subr.bf16.mxu0 %v2229
        %2364 = vmatpush2.bf16.msra.mxu0 %v2228
        %2365 = vmatprep.subr.bf16.mxu0 %v2225
        %2366 = vmatpush2.bf16.msra.mxu0 %v2224
        %2367 = vmatprep.subr.bf16.mxu0 %v2221
        %2368 = vmatpush2.bf16.msra.mxu0 %v2220
        %2369 = vmatprep.mubr.bf16.mxu0 %v1930
        %2370 = vmatmul.mubr.bf16.gmra.mxu0 %v1929
        %v2371 = vpop.f32.mrf.mxu0
        %v2372 = vadd.f32 %v2320, %v2371
        %v2373 = vpop.f32.mrf.mxu0
        %v2374 = vadd.f32 %v2324, %v2373
        %v2375 = vpop.f32.mrf.mxu0
        %v2376 = vpop.f32.mrf.mxu0
        %2377 = vdwg.mxu0
        %2378 = vmatprep.subr.bf16.mxu0 %v2219
        %2379 = vmatpush1.bf16.msra.mxu0 %v2218
        %2380 = vmatprep.subr.bf16.mxu0 %v2215
        %2381 = vmatpush1.bf16.msra.mxu0 %v2214
        %2382 = vmatprep.subr.bf16.mxu0 %v2211
        %2383 = vmatpush1.bf16.msra.mxu0 %v2210
        %2384 = vmatprep.subr.bf16.mxu0 %v2207
        %2385 = vmatpush1.bf16.msra.mxu0 %v2206
        %2386 = vmatprep.subr.bf16.mxu0 %v2203
        %2387 = vmatpush1.bf16.msra.mxu0 %v2202
        %2388 = vmatprep.subr.bf16.mxu0 %v2199
        %2389 = vmatpush1.bf16.msra.mxu0 %v2198
        %2390 = vmatprep.subr.bf16.mxu0 %v2195
        %2391 = vmatpush1.bf16.msra.mxu0 %v2194
        %2392 = vmatprep.subr.bf16.mxu0 %v2191
        %2393 = vmatpush1.bf16.msra.mxu0 %v2190
        %2394 = vmatprep.subr.bf16.mxu0 %v2251
        %2395 = vmatpush2.bf16.msra.mxu0 %v2250
        %2396 = vmatprep.subr.bf16.mxu0 %v2247
        %2397 = vmatpush2.bf16.msra.mxu0 %v2246
        %2398 = vmatprep.subr.bf16.mxu0 %v2243
        %2399 = vmatpush2.bf16.msra.mxu0 %v2242
        %2400 = vmatprep.subr.bf16.mxu0 %v2239
        %2401 = vmatpush2.bf16.msra.mxu0 %v2238
        %2402 = vmatprep.subr.bf16.mxu0 %v2235
        %2403 = vmatpush2.bf16.msra.mxu0 %v2234
        %2404 = vmatprep.subr.bf16.mxu0 %v2231
        %2405 = vmatpush2.bf16.msra.mxu0 %v2230
        %2406 = vmatprep.subr.bf16.mxu0 %v2227
        %2407 = vmatpush2.bf16.msra.mxu0 %v2226
        %2408 = vmatprep.subr.bf16.mxu0 %v2223
        %2409 = vmatpush2.bf16.msra.mxu0 %v2222
        %2410 = vmatprep.mubr.bf16.mxu0 %v1930
        %2411 = vmatmul.mubr.bf16.gmra.mxu0 %v1929
        %v2412 = vpop.f32.mrf.mxu0
        %v2413 = vadd.f32 %v2328, %v2412
        %v2414 = vpop.f32.mrf.mxu0
        %v2415 = vadd.f32 %v2332, %v2414
        %v2416 = vpop.f32.mrf.mxu0
        %v2417 = vpop.f32.mrf.mxu0
        %2418 = vdwg.mxu0
        %v2419 = vsel %vm367, %v2372, -inf
        %v2420 = vsel %vm367, %v2374, -inf
        %v2421 = vsel %vm367, %v2413, -inf
        %v2422 = vsel %vm367, %v2415, -inf
        %v2423 = vmax.f32 %v2419, %v2420
        %v2424 = vmax.f32 %v2421, %v2422
        %v2425 = vmax.f32 %v2423, %v2424
        %2426 = vmax.xlane.f32.xlu0 %v2425
        %v2427 = vpop.xlane.xlu0 %2426
        %v2428 = vsub.f32 %v2372, %v2427
        %v2429 = vsub.f32 %v2374, %v2427
        %v2430 = vsub.f32 %v2413, %v2427
        %v2431 = vsub.f32 %v2415, %v2427
        %v2432 = vmul.f32 %v2428, 1.442695
        %v2433 = vpow.pop %v2432
        %v2434 = vmul.f32 %v2429, 1.442695
        %v2435 = vpow.pop %v2434
        %v2436 = vmul.f32 %v2430, 1.442695
        %v2437 = vpow.pop %v2436
        %v2438 = vmul.f32 %v2431, 1.442695
        %v2439 = vpow.pop %v2438
        %v2440 = vsel %vm367, %v2433, 0.0
        %v2441 = vsel %vm367, %v2435, 0.0
        %v2442 = vadd.f32 %v2440, %v2441
        %v2443 = vsel %vm367, %v2437, 0.0
        %v2444 = vadd.f32 %v2442, %v2443
        %v2445 = vsel %vm367, %v2439, 0.0
        %v2446 = vadd.f32 %v2444, %v2445
        %2447 = vadd.xlane.f32.xlu0 %v2446
        %v2448 = vpop.xlane.xlu0 %2447
        %v2449 = vlog2.pop %v2448
        %v2450 = vmul.f32 %v2449, 0.6931472
        %v2451 = vsub.f32 %v2428, %v2450
        %v2452 = vsub.f32 %v2429, %v2450
        %v2453 = vsub.f32 %v2430, %v2450
        %v2454 = vsub.f32 %v2431, %v2450
        %v2459 = vcombine.low %v2451, %v2452
        %v2460 = vcombine.low %v2453, %v2454
        %v2462 = vunpack.c.l.s4 1966171168
        %v2463 = vunpack.c.0.s8 %v2462
        %v2464 = vlaneseq
        %v2465 = vshrl.u32 %v2464, 7
        %v2466 = vsub.s32 %v2463, %v2465
        %v2467 = vrot.slane %v2459, %v2466
        %v2469 = vunpack.c.l.s4 1966171168
        %v2470 = vunpack.c.0.s8 %v2469
        %v2471 = vlaneseq
        %v2472 = vshrl.u32 %v2471, 7
        %v2473 = vsub.s32 %v2470, %v2472
        %v2474 = vrot.slane %v2460, %v2473
        %v2475 = vcombine.low %v2467, %v2474
        %v2477 = vunpack.c.l.s4 1966171168
        %v2478 = vunpack.c.0.s8 %v2477
        %v2479 = vlaneseq
        %v2480 = vshrl.u32 %v2479, 7
        %v2481 = vsub.s32 %v2478, %v2480
        %v2482 = vrot.slane %v2475, %v2481
        %vm2484 = vcmp.lt.s32.totalorder %v1924, 512
        %vm2485 = vmand %vm1925, %vm2484
        %2486 = vst.msk [vmem:[%s323] sm:$0xf] %vm2485, %v2482
        %s2487 = sand.u32 %s186, 1
        %s2488 = scalar_lea.sflag [#allocation4], %s2487
        %s2489 = sand.u32 %s186, 1
        %s2490 = smul.addr %s2489, 4
        %s2491 = scalar_lea.vmem [#allocation7], %s2490
        // Predicated region
        $region61: #{tpu_custom_call.1} parent=47 // pred_check
          %p2492 = pneg %p196
        $region62: #{tpu_custom_call.1} parent=47 // pred_check_branch
          %2494 = sbr.rel (%p2492) target = $region64
        $region63: #{tpu_custom_call.1} parent=47 // pred_region
          %s2496 = ssub.s32 64, 64
          %2497 = vsyncadd %s2488, %s2496
          %s2498 = smul.addr %s26, 4
          %s2499 = smul.addr %s2498, 16
          %s2500 = scalar_lea.hbm %s7, %s2499
          %s2502 = sshll.u32 %s2491, 4
          %s2503 = int_to_ptr.vmem [resolvable:$true] %s2502
          %2505 = dma.vmem_to_hbm [thread:$0]  %s2503, 64, %s2500, %s2488
        $region64: #{tpu_custom_call.1} parent=47 // pred_fallthru
          _
        // Predicated region
        $region65: #{tpu_custom_call.1} parent=47 // pred_check
          %p2506 = pneg %p217
        $region66: #{tpu_custom_call.1} parent=47 // pred_check_branch
          %2508 = sbr.rel (%p2506) target = $region68
        $region67: #{tpu_custom_call.1} parent=47 // pred_region
          %s2510 = ssub.s32 32, 32
          %2511 = vsyncadd [#allocation9], %s2510
          %s2513 = sshll.u32 [#allocation8], 4
          %s2514 = int_to_ptr.vmem [resolvable:$true] %s2513
          %2516 = dma.vmem_to_hbm [thread:$0]  %s2514, 32, %s8, [#allocation9]
        $region68: #{tpu_custom_call.1} parent=47 // pred_fallthru
          _
        // Predicated region
        $region69: #{tpu_custom_call.1} parent=47 // pred_check
          %p2517 = pneg %p217
        $region70: #{tpu_custom_call.1} parent=47 // pred_check_branch
          %2519 = sbr.rel (%p2517) target = $region72
        $region71: #{tpu_custom_call.1} parent=47 // pred_region
          %2520 = dma.done [#allocation9], 32
        $region72: #{tpu_custom_call.1} parent=47 // pred_fallthru
          _
      $region48: #{tpu_custom_call.1} parent=5 // pred_fallthru
        _
      %p2521 = scmp.le.s32.totalorder 2, %s21
      // Predicated region
      $region73: #{tpu_custom_call.1} parent=5 // pred_check
        %p2522 = pneg %p2521
      $region74: #{tpu_custom_call.1} parent=5 // pred_check_branch
        %2524 = sbr.rel (%p2522) target = $region76
      $region75: #{tpu_custom_call.1} parent=5 // pred_region
        %s2525 = ssub.s32 %s21, 2
        // Predicated region
        $region77: #{tpu_custom_call.1} parent=75 // pred_check
          %p2526 = pneg %p202
        $region78: #{tpu_custom_call.1} parent=75 // pred_check_branch
          %2528 = sbr.rel (%p2526) target = $region80
        $region79: #{tpu_custom_call.1} parent=75 // pred_region
          %s2529 = sand.u32 %s187, 1
          %s2530 = scalar_lea.sflag [#allocation4], %s2529
          %s2531 = sand.u32 %s187, 1
          %s2532 = smul.addr %s2531, 4
          %s2533 = scalar_lea.vmem [#allocation7], %s2532
          %2534 = dma.done %s2530, 64
        $region80: #{tpu_custom_call.1} parent=75 // pred_fallthru
          _
      $region76: #{tpu_custom_call.1} parent=5 // pred_fallthru
        _
    $region6: #{tpu_custom_call.1} parent=1 // loop_footer
      %s25 = sadd.s32 1, %s21
    $region7: #{tpu_custom_call.1} parent=1 // loop_footer_branch
      %20 = sbr.rel target = $region3
    $region8: #{tpu_custom_call.1} parent=1 // loop_exit
      _
    %2535 = vsyncpa [#allocation3], 1
    %s2536 = scalar_lea.sflag [#allocation3], 1
    %2537 = vsyncpa %s2536, 1
    %2538 = vsyncpa [#allocation6], 1
    %2539 = vsyncpa [#allocation4], 1
    %s2540 = scalar_lea.sflag [#allocation4], 1
    %2541 = vsyncpa %s2540, 1
    %2542 = vsyncpa [#allocation9], 1

</llo_original>
